<compile_context>
chip_gen: v6e
topology: v6e:2x2x1
jax: 0.10.0
libtpu: 0.0.40
codegen_flags: <defaults>
</compile_context>

<pallas_src>
import functools

import jax
import jax.numpy as jnp
from jax.experimental import pallas as pl
from jax.experimental.pallas import tpu as pltpu

EPS = 1.1920929e-07  # torch.finfo(torch.float32).eps (nn.RMSNorm default eps)

# contract over axis 0 of both operands (lhs^T @ rhs); same dimension numbers
# as the TN case in the official Pallas TPU flash-attention kernels.
_TN = (((0,), (0,)), ((), ()))


# ---------------------------------------------------------------------------
# Fused per-batch kernel: encoder + mixer trunk + decoder
# ---------------------------------------------------------------------------
def _fused_kernel(*refs, num_blocks, use_init_mixer):
    (t_ref, x_ref, m_ref, yt_ref,
     eiw1, eib1, eiw2t, eib2, ekw1, ekb1, ekw2t, ekb2, cb) = refs[:13]
    idx = 13
    if num_blocks > 0:
        cm_rmst, cm_w, cm_b, km_rms, km_wt, km_b = refs[idx:idx + 6]
        idx += 6
    (icm_rmst, icm_w, icm_b, ol_rms, ol_wt, ol_b,
     ow1, ob1, w2aug, headw, headb, o_ref) = refs[idx:idx + 12]

    # ---------------- encoder: factorized masked-softmax aggregation --------
    t = t_ref[0]                                                   # [L, 1]
    x = x_ref[0]                                                   # [L, C]
    m = m_ref[0]                                                   # [L, C]

    # time-kernel MLPs (channel-invariant for 2-D T) -> computed once per batch
    hi = jnp.maximum(t * eiw1[...] + eib1[...], 0.0)               # [L, KH]
    init_k = jnp.dot(hi, eiw2t[...],
                     preferred_element_type=jnp.float32) + eib2[...]   # [L, H]
    hk = jnp.maximum(t * ekw1[...] + ekb1[...], 0.0)
    wraw = jnp.dot(hk, ekw2t[...],
                   preferred_element_type=jnp.float32) + ekb2[...]     # [L, H]

    # per-factor stabilization: xmax over OBSERVED entries only (matches the
    # reference, where masked logits sit at ~-1e10 and never win the max);
    # fully-unobserved channels are floored to 0 so exp stays finite.
    xmax = jnp.max(x + (m - 1.0) * 1e10, axis=0, keepdims=True)    # [1, C]
    xmax = jnp.where(xmax > -1e9, xmax, 0.0)
    a = jnp.exp(jnp.where(m > 0.0, x - xmax, -1e4))                # [L, C]; exactly 0 when masked
    wmax = jnp.max(wraw, axis=0, keepdims=True)                    # [1, H]
    bfac = jnp.exp(wraw - wmax)                                    # [L, H]

    # softmax-weighted aggregation as two MXU matmuls (no [L, C*H] expansion)
    num = jax.lax.dot_general(x * a, init_k * bfac, _TN,
                              preferred_element_type=jnp.float32)  # [C, H]
    den = jax.lax.dot_general(a, bfac, _TN,
                              preferred_element_type=jnp.float32)  # [C, H]
    # den == 0 exactly iff the channel was never observed (a == 0 there), and
    # then num == 0 too, so this reproduces `* channel_mask` from the reference.
    den_safe = jnp.where(den > 0.0, den, 1.0)
    z = num / den_safe + cb[...]                                   # [C, H]

    # ---------------- mixer trunk (z stays resident in VMEM) ----------------
    for i in range(num_blocks):
        zz = z
        # channel mixer: RMSNorm([H, C]) (kept in [C, H] layout), Linear(C, C), ReLU
        r1 = jax.lax.rsqrt(jnp.mean(zz * zz, keepdims=True) + EPS)
        n1 = zz * r1 * cm_rmst[i]
        cmix = jnp.maximum(jnp.dot(cm_w[i], n1,
                                   preferred_element_type=jnp.float32) + cm_b[i], 0.0)
        z1 = zz + cmix
        # kernel mixer: RMSNorm([C, H]), Linear(H, H), ReLU
        r2 = jax.lax.rsqrt(jnp.mean(z1 * z1, keepdims=True) + EPS)
        n2 = z1 * r2 * km_rms[i]
        kmix = jnp.maximum(jnp.dot(n2, km_wt[i],
                                   preferred_element_type=jnp.float32) + km_b[i], 0.0)
        z = zz + (z1 + kmix)                                       # z + MixerBlock(z)

    if use_init_mixer:
        r1 = jax.lax.rsqrt(jnp.mean(z * z, keepdims=True) + EPS)
        n1 = z * r1 * icm_rmst[...]
        cmix = jnp.maximum(jnp.dot(icm_w[...], n1,
                                   preferred_element_type=jnp.float32) + icm_b[...], 0.0)
        z = z + cmix

    # out_layer: RMSNorm([C, H]) then Linear(H, HD)
    r2 = jax.lax.rsqrt(jnp.mean(z * z, keepdims=True) + EPS)
    n2 = z * r2 * ol_rms[...]
    zo = jnp.dot(n2, ol_wt[...],
                 preferred_element_type=jnp.float32) + ol_b[...]   # [C, HD]

    # ---------------- decoder: HD reduction folded into the weights ---------
    zw = zo * headw[...]                                           # [C, HD]  (zo * head_W)
    # Weff[k, c] = sum_d W2aug[k, c, d] * zw[c, d]; last row of W2aug is the
    # out_kernel bias, so the bias folds into Weff as well.
    weff = jnp.sum(w2aug[...] * zw[None, :, :], axis=-1)           # [KH+1, C]
    yt = yt_ref[0]                                                 # [LY, 1]
    # ow1/ob1 are padded so the last column of h is exactly 1 (bias row of Weff)
    h = jnp.maximum(yt * ow1[...] + ob1[...], 0.0)                 # [LY, KH+1]
    o_ref[0] = jnp.dot(h, weff,
                       preferred_element_type=jnp.float32) + headb[...]   # [LY, C]


# ---------------------------------------------------------------------------
# Wrapper: one pallas_call over the batch grid
# ---------------------------------------------------------------------------
def imts_mixer_forward(p, T, X, M, YT, MY=None, *, mixer_blocks):
    del MY  # unused by the PyTorch forward
    B, L, C = X.shape
    H = p["enc_init_W2"].shape[0]
    HD = p["ol_W"].shape[0]
    KH = p["enc_init_W1"].shape[0]
    LY = YT.shape[1]
    NB = len(p["blocks"])
    use_init = mixer_blocks > 0

    if T.ndim != 2:
        # TODO(synk): per-channel (3-D) timestamps need a per-channel time-MLP
        # path; the fused encoder hoists the time-MLPs assuming channel-shared T.
        raise NotImplementedError("3-D T is not supported by the fused kernel")

    Mf = M.astype(jnp.float32)
    T3 = T[:, :, None]                                             # [B, L, 1]
    YT3 = YT[:, :, None]                                           # [B, LY, 1]

    # decoder weight prep (one time, outside the kernel):
    #   W2aug[:KH]  = out_kernel W2^T reshaped to [KH, C, HD]
    #   W2aug[KH]   = out_kernel b2 reshaped to  [C, HD]   (bias row)
    W2aug = jnp.concatenate(
        [p["outk_W2"].T.reshape(KH, C, HD), p["outk_b2"].reshape(1, C, HD)], axis=0)
    ow1_aug = jnp.concatenate([p["outk_W1"].T, jnp.zeros((1, 1), jnp.float32)], axis=1)
    ob1_aug = jnp.concatenate([p["outk_b1"][None, :], jnp.ones((1, 1), jnp.float32)], axis=1)

    ins = [T3, X, Mf, YT3,
           p["enc_init_W1"].T, p["enc_init_b1"][None, :],
           p["enc_init_W2"].T, p["enc_init_b2"][None, :],
           p["enc_ker_W1"].T, p["enc_ker_b1"][None, :],
           p["enc_ker_W2"].T, p["enc_ker_b2"][None, :],
           p["channel_bias"]]
    specs = [
        pl.BlockSpec((1, L, 1), lambda b: (b, 0, 0)),              # T
        pl.BlockSpec((1, L, C), lambda b: (b, 0, 0)),              # X
        pl.BlockSpec((1, L, C), lambda b: (b, 0, 0)),              # M
        pl.BlockSpec((1, LY, 1), lambda b: (b, 0, 0)),             # YT
        pl.BlockSpec((1, KH), lambda b: (0, 0)),                   # init W1^T
        pl.BlockSpec((1, KH), lambda b: (0, 0)),                   # init b1
        pl.BlockSpec((KH, H), lambda b: (0, 0)),                   # init W2^T
        pl.BlockSpec((1, H), lambda b: (0, 0)),                    # init b2
        pl.BlockSpec((1, KH), lambda b: (0, 0)),                   # ker W1^T
        pl.BlockSpec((1, KH), lambda b: (0, 0)),                   # ker b1
        pl.BlockSpec((KH, H), lambda b: (0, 0)),                   # ker W2^T
        pl.BlockSpec((1, H), lambda b: (0, 0)),                    # ker b2
        pl.BlockSpec((C, H), lambda b: (0, 0)),                    # channel_bias
    ]
    if NB > 0:
        ins += [
            jnp.stack([blk["cm_rms"].T for blk in p["blocks"]]),   # [NB, C, H]
            jnp.stack([blk["cm_W"] for blk in p["blocks"]]),       # [NB, C, C]
            jnp.stack([blk["cm_b"][:, None] for blk in p["blocks"]]),   # [NB, C, 1]
            jnp.stack([blk["km_rms"] for blk in p["blocks"]]),     # [NB, C, H]
            jnp.stack([blk["km_W"].T for blk in p["blocks"]]),     # [NB, H, H]
            jnp.stack([blk["km_b"][None, :] for blk in p["blocks"]]),   # [NB, 1, H]
        ]
        specs += [
            pl.BlockSpec((NB, C, H), lambda b: (0, 0, 0)),
            pl.BlockSpec((NB, C, C), lambda b: (0, 0, 0)),
            pl.BlockSpec((NB, C, 1), lambda b: (0, 0, 0)),
            pl.BlockSpec((NB, C, H), lambda b: (0, 0, 0)),
            pl.BlockSpec((NB, H, H), lambda b: (0, 0, 0)),
            pl.BlockSpec((NB, 1, H), lambda b: (0, 0, 0)),
        ]
    ins += [p["icm_rms"].T, p["icm_W"], p["icm_b"][:, None],
            p["ol_rms"], p["ol_W"].T, p["ol_b"][None, :],
            ow1_aug, ob1_aug, W2aug, p["head_W"], p["head_b"][None, :]]
    specs += [
        pl.BlockSpec((C, H), lambda b: (0, 0)),                    # icm rms^T
        pl.BlockSpec((C, C), lambda b: (0, 0)),                    # icm W
        pl.BlockSpec((C, 1), lambda b: (0, 0)),                    # icm b
        pl.BlockSpec((C, H), lambda b: (0, 0)),                    # ol rms
        pl.BlockSpec((H, HD), lambda b: (0, 0)),                   # ol W^T
        pl.BlockSpec((1, HD), lambda b: (0, 0)),                   # ol b
        pl.BlockSpec((1, KH + 1), lambda b: (0, 0)),               # out W1^T (padded)
        pl.BlockSpec((1, KH + 1), lambda b: (0, 0)),               # out b1 (padded)
        pl.BlockSpec((KH + 1, C, HD), lambda b: (0, 0, 0)),        # out W2 + b2 (reshaped)
        pl.BlockSpec((1, HD), lambda b: (0, 0)),                   # head W
        pl.BlockSpec((1, 1), lambda b: (0, 0)),                    # head b
    ]

    out = pl.pallas_call(
        functools.partial(_fused_kernel, num_blocks=NB, use_init_mixer=use_init),
        grid=(B,),
        in_specs=specs,
        out_specs=pl.BlockSpec((1, LY, C), lambda b: (b, 0, 0)),
        out_shape=jax.ShapeDtypeStruct((B, LY, C), jnp.float32),
        compiler_params=pltpu.CompilerParams(dimension_semantics=("parallel",)),
    )(*ins)
    return out                                                     # [B, LY, C]


# ---------------------------------------------------------------------------
# Deterministic parameter initialization (shapes from the PyTorch __init__)
# ---------------------------------------------------------------------------
def init_params(key, C, H, HD, KH, MB):
    keys = iter(jax.random.split(key, 64))

    def lin(out_d, in_d):
        k1, k2 = next(keys), next(keys)
        bound = 1.0 / (in_d ** 0.5)
        W = jax.random.uniform(k1, (out_d, in_d), jnp.float32, -bound, bound)
        b = jax.random.uniform(k2, (out_d,), jnp.float32, -bound, bound)
        return W, b

    def rms_w(shape):
        return 1.0 + 0.05 * jax.random.normal(next(keys), shape, jnp.float32)

    p = {}
    p["enc_init_W1"], p["enc_init_b1"] = lin(KH, 1)
    p["enc_init_W2"], p["enc_init_b2"] = lin(H, KH)
    p["enc_ker_W1"], p["enc_ker_b1"] = lin(KH, 1)
    p["enc_ker_W2"], p["enc_ker_b2"] = lin(H, KH)
    p["channel_bias"] = jax.random.normal(next(keys), (C, H), jnp.float32)
    blocks = []
    for _ in range(max(MB - 1, 0)):
        cm_W, cm_b = lin(C, C)
        km_W, km_b = lin(H, H)
        blocks.append(dict(cm_rms=rms_w((H, C)), cm_W=cm_W, cm_b=cm_b,
                           km_rms=rms_w((C, H)), km_W=km_W, km_b=km_b))
    p["blocks"] = blocks
    p["icm_rms"] = rms_w((H, C))
    p["icm_W"], p["icm_b"] = lin(C, C)
    p["ol_rms"] = rms_w((C, H))
    p["ol_W"], p["ol_b"] = lin(HD, H)
    p["outk_W1"], p["outk_b1"] = lin(KH, 1)
    p["outk_W2"], p["outk_b2"] = lin(HD * C, KH)
    p["head_W"], p["head_b"] = lin(1, HD)
    return p


# ---------------------------------------------------------------------------
# Pure-JAX reference (mirrors the PyTorch code) for validation
# ---------------------------------------------------------------------------
def reference_forward(p, T, X, M, YT, *, mixer_blocks):
    B, L, C = X.shape
    H = p["enc_init_W2"].shape[0]
    HD = p["ol_W"].shape[0]
    LY = YT.shape[1]
    Mb = M.astype(bool)
    T3 = jnp.broadcast_to(T[:, :, None], X.shape) if T.ndim == 2 else T
    X_enc = jnp.broadcast_to(X[..., None], (B, L, C, H))

    def mlp1(t, W1, b1, W2, b2):
        h = jnp.maximum(t[..., None] * W1[:, 0] + b1, 0.0)
        return h @ W2.T + b2

    init_k = mlp1(T3, p["enc_init_W1"], p["enc_init_b1"], p["enc_init_W2"], p["enc_init_b2"])
    Z_enc = X_enc * init_k
    w = mlp1(T3, p["enc_ker_W1"], p["enc_ker_b1"], p["enc_ker_W2"], p["enc_ker_b2"]) + X_enc
    w = w - (~Mb)[..., None].astype(jnp.float32) * 1e10
    w = jax.nn.softmax(w, axis=1)
    cmask = (jnp.sum(Mb, axis=1) > 0).astype(jnp.float32)
    z = jnp.sum(Z_enc * w, axis=1) * cmask[..., None]
    z = z + p["channel_bias"][None]

    def rms(x, weight):
        ms = jnp.mean(x * x, axis=(-2, -1), keepdims=True)
        return x * jax.lax.rsqrt(ms + EPS) * weight

    for blk in p["blocks"]:
        zz = z
        zt = jnp.swapaxes(zz, 1, 2)
        cm = jnp.maximum(rms(zt, blk["cm_rms"]) @ blk["cm_W"].T + blk["cm_b"], 0.0)
        z1 = zz + jnp.swapaxes(cm, 1, 2)
        km = jnp.maximum(rms(z1, blk["km_rms"]) @ blk["km_W"].T + blk["km_b"], 0.0)
        z = z + (z1 + km)
    if mixer_blocks > 0:
        zt = jnp.swapaxes(z, 1, 2)
        cm = jnp.maximum(rms(zt, p["icm_rms"]) @ p["icm_W"].T + p["icm_b"], 0.0)
        z = z + jnp.swapaxes(cm, 1, 2)
    zo = rms(z, p["ol_rms"]) @ p["ol_W"].T + p["ol_b"]              # [B, C, HD]

    yhat = jnp.broadcast_to(zo[:, None], (B, LY, C, HD))
    hq = jnp.maximum(YT[..., None] * p["outk_W1"][:, 0] + p["outk_b1"], 0.0)
    query = (hq @ p["outk_W2"].T + p["outk_b2"]).reshape(B, LY, C, HD)
    out = jnp.sum(yhat * query * p["head_W"][0], axis=-1) + p["head_b"][0]
    return out                                                      # [B, LY, C]


# ---------------------------------------------------------------------------
if __name__ == "__main__":
    B, L, LY = 2, 16, 8
    C, H, HD, KH, MB = 4, 32, 16, 8, 2

    root = jax.random.PRNGKey(0)
    kp, kT, kX, kM, kYT = jax.random.split(root, 5)
    params = init_params(kp, C, H, HD, KH, MB)

    T = jnp.sort(jax.random.uniform(kT, (B, L), jnp.float32), axis=1)
    X = jax.random.normal(kX, (B, L, C), jnp.float32)
    M = (jax.random.uniform(kM, (B, L, C)) > 0.3).astype(jnp.float32)
    M = M.at[0, :, 1].set(0.0)   # fully-unobserved channel to exercise the den==0 path
    YT = jnp.sort(jax.random.uniform(kYT, (B, LY), jnp.float32), axis=1)
    MY = jnp.ones((B, LY, C), jnp.float32)  # unused by forward (signature parity)

    out = imts_mixer_forward(params, T, X, M, YT, MY, mixer_blocks=MB)
    out = jax.block_until_ready(out)

    ref = reference_forward(params, T, X, M, YT, mixer_blocks=MB)

    assert out.shape == (B, LY, C), out.shape
    assert bool(jnp.all(jnp.isfinite(out)))
    # The kernel runs every matmul (including the factorized softmax aggregation)
    # on the default bf16-operand / f32-accumulate MXU path, while the reference's
    # aggregation is pure-f32 elementwise math, so allow a 2e-2 elementwise gap.
    diff = jnp.abs(out - ref)
    ok = bool(jnp.all(diff <= 2e-2 + 2e-2 * jnp.abs(ref)))
    assert ok, f"max abs error vs reference: {float(jnp.max(diff))}"
    print("KERNEL_OK")
</pallas_src>

<mosaic_0001>
module attributes {stable_mosaic.version = 11 : i64} {
  func.func @_fused_kernel(%arg0: i32, %arg1: memref<1x16x1xf32, #tpu.memory_space<vmem>>, %arg2: memref<1x16x4xf32, #tpu.memory_space<vmem>>, %arg3: memref<1x16x4xf32, #tpu.memory_space<vmem>>, %arg4: memref<1x8x1xf32, #tpu.memory_space<vmem>>, %arg5: memref<1x8xf32, #tpu.memory_space<vmem>>, %arg6: memref<1x8xf32, #tpu.memory_space<vmem>>, %arg7: memref<8x32xf32, #tpu.memory_space<vmem>>, %arg8: memref<1x32xf32, #tpu.memory_space<vmem>>, %arg9: memref<1x8xf32, #tpu.memory_space<vmem>>, %arg10: memref<1x8xf32, #tpu.memory_space<vmem>>, %arg11: memref<8x32xf32, #tpu.memory_space<vmem>>, %arg12: memref<1x32xf32, #tpu.memory_space<vmem>>, %arg13: memref<4x32xf32, #tpu.memory_space<vmem>>, %arg14: memref<1x4x32xf32, #tpu.memory_space<vmem>>, %arg15: memref<1x4x4xf32, #tpu.memory_space<vmem>>, %arg16: memref<1x4x1xf32, #tpu.memory_space<vmem>>, %arg17: memref<1x4x32xf32, #tpu.memory_space<vmem>>, %arg18: memref<1x32x32xf32, #tpu.memory_space<vmem>>, %arg19: memref<1x1x32xf32, #tpu.memory_space<vmem>>, %arg20: memref<4x32xf32, #tpu.memory_space<vmem>>, %arg21: memref<4x4xf32, #tpu.memory_space<vmem>>, %arg22: memref<4x1xf32, #tpu.memory_space<vmem>>, %arg23: memref<4x32xf32, #tpu.memory_space<vmem>>, %arg24: memref<32x16xf32, #tpu.memory_space<vmem>>, %arg25: memref<1x16xf32, #tpu.memory_space<vmem>>, %arg26: memref<1x9xf32, #tpu.memory_space<vmem>>, %arg27: memref<1x9xf32, #tpu.memory_space<vmem>>, %arg28: memref<9x4x16xf32, #tpu.memory_space<vmem>>, %arg29: memref<1x16xf32, #tpu.memory_space<vmem>>, %arg30: memref<1x1xf32, #tpu.memory_space<vmem>>, %arg31: memref<1x8x4xf32, #tpu.memory_space<vmem>>) attributes {dimension_semantics = [#tpu.dimension_semantics<parallel>], iteration_bounds = array<i64: 2>, scalar_prefetch = 0 : i64, scratch_operands = 0 : i64, tpu.core_type = #tpu.core_type<tc>, window_params = [{transform_indices = @transform_0, window_bounds = array<i64: 1, 16, 1>}, {transform_indices = @transform_1, window_bounds = array<i64: 1, 16, 4>}, {transform_indices = @transform_2, window_bounds = array<i64: 1, 16, 4>}, {transform_indices = @transform_3, window_bounds = array<i64: 1, 8, 1>}, {pipeline_mode = #tpu.pipeline_mode<synchronous>, transform_indices = @transform_4, window_bounds = array<i64: 1, 8>}, {pipeline_mode = #tpu.pipeline_mode<synchronous>, transform_indices = @transform_5, window_bounds = array<i64: 1, 8>}, {pipeline_mode = #tpu.pipeline_mode<synchronous>, transform_indices = @transform_6, window_bounds = array<i64: 8, 32>}, {pipeline_mode = #tpu.pipeline_mode<synchronous>, transform_indices = @transform_7, window_bounds = array<i64: 1, 32>}, {pipeline_mode = #tpu.pipeline_mode<synchronous>, transform_indices = @transform_8, window_bounds = array<i64: 1, 8>}, {pipeline_mode = #tpu.pipeline_mode<synchronous>, transform_indices = @transform_9, window_bounds = array<i64: 1, 8>}, {pipeline_mode = #tpu.pipeline_mode<synchronous>, transform_indices = @transform_10, window_bounds = array<i64: 8, 32>}, {pipeline_mode = #tpu.pipeline_mode<synchronous>, transform_indices = @transform_11, window_bounds = array<i64: 1, 32>}, {pipeline_mode = #tpu.pipeline_mode<synchronous>, transform_indices = @transform_12, window_bounds = array<i64: 4, 32>}, {pipeline_mode = #tpu.pipeline_mode<synchronous>, transform_indices = @transform_13, window_bounds = array<i64: 1, 4, 32>}, {pipeline_mode = #tpu.pipeline_mode<synchronous>, transform_indices = @transform_14, window_bounds = array<i64: 1, 4, 4>}, {pipeline_mode = #tpu.pipeline_mode<synchronous>, transform_indices = @transform_15, window_bounds = array<i64: 1, 4, 1>}, {pipeline_mode = #tpu.pipeline_mode<synchronous>, transform_indices = @transform_16, window_bounds = array<i64: 1, 4, 32>}, {pipeline_mode = #tpu.pipeline_mode<synchronous>, transform_indices = @transform_17, window_bounds = array<i64: 1, 32, 32>}, {pipeline_mode = #tpu.pipeline_mode<synchronous>, transform_indices = @transform_18, window_bounds = array<i64: 1, 1, 32>}, {pipeline_mode = #tpu.pipeline_mode<synchronous>, transform_indices = @transform_19, window_bounds = array<i64: 4, 32>}, {pipeline_mode = #tpu.pipeline_mode<synchronous>, transform_indices = @transform_20, window_bounds = array<i64: 4, 4>}, {pipeline_mode = #tpu.pipeline_mode<synchronous>, transform_indices = @transform_21, window_bounds = array<i64: 4, 1>}, {pipeline_mode = #tpu.pipeline_mode<synchronous>, transform_indices = @transform_22, window_bounds = array<i64: 4, 32>}, {pipeline_mode = #tpu.pipeline_mode<synchronous>, transform_indices = @transform_23, window_bounds = array<i64: 32, 16>}, {pipeline_mode = #tpu.pipeline_mode<synchronous>, transform_indices = @transform_24, window_bounds = array<i64: 1, 16>}, {pipeline_mode = #tpu.pipeline_mode<synchronous>, transform_indices = @transform_25, window_bounds = array<i64: 1, 9>}, {pipeline_mode = #tpu.pipeline_mode<synchronous>, transform_indices = @transform_26, window_bounds = array<i64: 1, 9>}, {pipeline_mode = #tpu.pipeline_mode<synchronous>, transform_indices = @transform_27, window_bounds = array<i64: 9, 4, 16>}, {pipeline_mode = #tpu.pipeline_mode<synchronous>, transform_indices = @transform_28, window_bounds = array<i64: 1, 16>}, {pipeline_mode = #tpu.pipeline_mode<synchronous>, transform_indices = @transform_29, window_bounds = array<i64: 1, 1>}, {transform_indices = @transform_30, window_bounds = array<i64: 1, 8, 4>}]} {
    %c0 = arith.constant 0 : index
    %c0_0 = arith.constant 0 : index
    %c0_1 = arith.constant 0 : index
    %0 = vector.load %arg1[%c0, %c0_0, %c0_1] : memref<1x16x1xf32, #tpu.memory_space<vmem>>, vector<1x16x1xf32>
    %1 = vector.shape_cast %0 : vector<1x16x1xf32> to vector<16x1xf32>
    %c0_2 = arith.constant 0 : index
    %c0_3 = arith.constant 0 : index
    %c0_4 = arith.constant 0 : index
    %2 = vector.load %arg2[%c0_2, %c0_3, %c0_4] : memref<1x16x4xf32, #tpu.memory_space<vmem>>, vector<1x16x4xf32>
    %3 = vector.shape_cast %2 : vector<1x16x4xf32> to vector<16x4xf32>
    %c0_5 = arith.constant 0 : index
    %c0_6 = arith.constant 0 : index
    %c0_7 = arith.constant 0 : index
    %4 = vector.load %arg3[%c0_5, %c0_6, %c0_7] : memref<1x16x4xf32, #tpu.memory_space<vmem>>, vector<1x16x4xf32>
    %5 = vector.shape_cast %4 : vector<1x16x4xf32> to vector<16x4xf32>
    %c0_8 = arith.constant 0 : index
    %c0_9 = arith.constant 0 : index
    %6 = vector.load %arg5[%c0_8, %c0_9] : memref<1x8xf32, #tpu.memory_space<vmem>>, vector<1x8xf32>
    %7 = vector.broadcast %1 : vector<16x1xf32> to vector<16x8xf32>
    %8 = vector.broadcast %6 : vector<1x8xf32> to vector<16x8xf32>
    %9 = arith.mulf %7, %8 : vector<16x8xf32>
    %c0_10 = arith.constant 0 : index
    %c0_11 = arith.constant 0 : index
    %10 = vector.load %arg6[%c0_10, %c0_11] : memref<1x8xf32, #tpu.memory_space<vmem>>, vector<1x8xf32>
    %11 = vector.broadcast %10 : vector<1x8xf32> to vector<16x8xf32>
    %12 = arith.addf %9, %11 : vector<16x8xf32>
    %cst = arith.constant 0.000000e+00 : f32
    %13 = vector.broadcast %cst : f32 to vector<16x8xf32>
    %14 = arith.maximumf %12, %13 : vector<16x8xf32>
    %c0_12 = arith.constant 0 : index
    %c0_13 = arith.constant 0 : index
    %15 = vector.load %arg7[%c0_12, %c0_13] : memref<8x32xf32, #tpu.memory_space<vmem>>, vector<8x32xf32>
    %cst_14 = arith.constant dense<0.000000e+00> : vector<16x32xf32>
    %16 = tpu.matmul %14, %15, %cst_14 {dimension_numbers = #tpu.dot_dimension_numbers<[1], [0], [0], [1], [0, 0, 1, 1], [], []>} : vector<16x8xf32>, vector<8x32xf32>, vector<16x32xf32> -> vector<16x32xf32>
    %c0_15 = arith.constant 0 : index
    %c0_16 = arith.constant 0 : index
    %17 = vector.load %arg8[%c0_15, %c0_16] : memref<1x32xf32, #tpu.memory_space<vmem>>, vector<1x32xf32>
    %18 = vector.broadcast %17 : vector<1x32xf32> to vector<16x32xf32>
    %19 = arith.addf %16, %18 : vector<16x32xf32>
    %c0_17 = arith.constant 0 : index
    %c0_18 = arith.constant 0 : index
    %20 = vector.load %arg9[%c0_17, %c0_18] : memref<1x8xf32, #tpu.memory_space<vmem>>, vector<1x8xf32>
    %21 = vector.broadcast %1 : vector<16x1xf32> to vector<16x8xf32>
    %22 = vector.broadcast %20 : vector<1x8xf32> to vector<16x8xf32>
    %23 = arith.mulf %21, %22 : vector<16x8xf32>
    %c0_19 = arith.constant 0 : index
    %c0_20 = arith.constant 0 : index
    %24 = vector.load %arg10[%c0_19, %c0_20] : memref<1x8xf32, #tpu.memory_space<vmem>>, vector<1x8xf32>
    %25 = vector.broadcast %24 : vector<1x8xf32> to vector<16x8xf32>
    %26 = arith.addf %23, %25 : vector<16x8xf32>
    %cst_21 = arith.constant 0.000000e+00 : f32
    %27 = vector.broadcast %cst_21 : f32 to vector<16x8xf32>
    %28 = arith.maximumf %26, %27 : vector<16x8xf32>
    %c0_22 = arith.constant 0 : index
    %c0_23 = arith.constant 0 : index
    %29 = vector.load %arg11[%c0_22, %c0_23] : memref<8x32xf32, #tpu.memory_space<vmem>>, vector<8x32xf32>
    %cst_24 = arith.constant dense<0.000000e+00> : vector<16x32xf32>
    %30 = tpu.matmul %28, %29, %cst_24 {dimension_numbers = #tpu.dot_dimension_numbers<[1], [0], [0], [1], [0, 0, 1, 1], [], []>} : vector<16x8xf32>, vector<8x32xf32>, vector<16x32xf32> -> vector<16x32xf32>
    %c0_25 = arith.constant 0 : index
    %c0_26 = arith.constant 0 : index
    %31 = vector.load %arg12[%c0_25, %c0_26] : memref<1x32xf32, #tpu.memory_space<vmem>>, vector<1x32xf32>
    %32 = vector.broadcast %31 : vector<1x32xf32> to vector<16x32xf32>
    %33 = arith.addf %30, %32 : vector<16x32xf32>
    %cst_27 = arith.constant 1.000000e+00 : f32
    %34 = vector.broadcast %cst_27 : f32 to vector<16x4xf32>
    %35 = arith.subf %5, %34 : vector<16x4xf32>
    %cst_28 = arith.constant 1.000000e+10 : f32
    %36 = vector.broadcast %cst_28 : f32 to vector<16x4xf32>
    %37 = arith.mulf %35, %36 : vector<16x4xf32>
    %38 = arith.addf %3, %37 : vector<16x4xf32>
    %cst_29 = arith.constant dense<0xFF800000> : vector<4xf32>
    %39 = vector.multi_reduction <maximumf>, %38, %cst_29 [0] : vector<16x4xf32> to vector<4xf32>
    %40 = vector.shape_cast %39 : vector<4xf32> to vector<1x4xf32>
    %cst_30 = arith.constant -1.000000e+09 : f32
    %41 = vector.broadcast %cst_30 : f32 to vector<1x4xf32>
    %42 = arith.cmpf ogt, %40, %41 : vector<1x4xf32>
    %cst_31 = arith.constant 0.000000e+00 : f32
    %43 = vector.broadcast %cst_31 : f32 to vector<1x4xf32>
    %44 = arith.select %42, %40, %43 : vector<1x4xi1>, vector<1x4xf32>
    %cst_32 = arith.constant 0.000000e+00 : f32
    %45 = vector.broadcast %cst_32 : f32 to vector<16x4xf32>
    %46 = arith.cmpf ogt, %5, %45 : vector<16x4xf32>
    %47 = vector.broadcast %44 : vector<1x4xf32> to vector<16x4xf32>
    %48 = arith.subf %3, %47 : vector<16x4xf32>
    %cst_33 = arith.constant -1.000000e+04 : f32
    %49 = vector.broadcast %cst_33 : f32 to vector<16x4xf32>
    %50 = arith.select %46, %48, %49 : vector<16x4xi1>, vector<16x4xf32>
    %51 = math.exp %50 : vector<16x4xf32>
    %cst_34 = arith.constant dense<0xFF800000> : vector<32xf32>
    %52 = vector.multi_reduction <maximumf>, %33, %cst_34 [0] : vector<16x32xf32> to vector<32xf32>
    %53 = vector.shape_cast %52 : vector<32xf32> to vector<1x32xf32>
    %54 = vector.broadcast %53 : vector<1x32xf32> to vector<16x32xf32>
    %55 = arith.subf %33, %54 : vector<16x32xf32>
    %56 = math.exp %55 : vector<16x32xf32>
    %57 = arith.mulf %3, %51 : vector<16x4xf32>
    %58 = arith.mulf %19, %56 : vector<16x32xf32>
    %cst_35 = arith.constant dense<0.000000e+00> : vector<4x32xf32>
    %59 = tpu.matmul %57, %58, %cst_35 {dimension_numbers = #tpu.dot_dimension_numbers<[0], [0], [1], [1], [0, 1, 1, 1], [], []>} : vector<16x4xf32>, vector<16x32xf32>, vector<4x32xf32> -> vector<4x32xf32>
    %cst_36 = arith.constant dense<0.000000e+00> : vector<4x32xf32>
    %60 = tpu.matmul %51, %56, %cst_36 {dimension_numbers = #tpu.dot_dimension_numbers<[0], [0], [1], [1], [0, 1, 1, 1], [], []>} : vector<16x4xf32>, vector<16x32xf32>, vector<4x32xf32> -> vector<4x32xf32>
    %cst_37 = arith.constant 0.000000e+00 : f32
    %61 = vector.broadcast %cst_37 : f32 to vector<4x32xf32>
    %62 = arith.cmpf ogt, %60, %61 : vector<4x32xf32>
    %cst_38 = arith.constant 1.000000e+00 : f32
    %63 = vector.broadcast %cst_38 : f32 to vector<4x32xf32>
    %64 = arith.select %62, %60, %63 : vector<4x32xi1>, vector<4x32xf32>
    %65 = arith.divf %59, %64 : vector<4x32xf32>
    %c0_39 = arith.constant 0 : index
    %c0_40 = arith.constant 0 : index
    %66 = vector.load %arg13[%c0_39, %c0_40] : memref<4x32xf32, #tpu.memory_space<vmem>>, vector<4x32xf32>
    %67 = arith.addf %65, %66 : vector<4x32xf32>
    %68 = arith.mulf %67, %67 : vector<4x32xf32>
    %69 = vector.shape_cast %68 : vector<4x32xf32> to vector<1x4x32xf32>
    %cst_41 = arith.constant dense<0.000000e+00> : vector<1xf32>
    %70 = vector.multi_reduction <add>, %69, %cst_41 [1, 2] : vector<1x4x32xf32> to vector<1xf32>
    %71 = vector.shape_cast %70 : vector<1xf32> to vector<1x1x1xf32>
    %72 = vector.extract %71[0, 0, 0] : f32 from vector<1x1x1xf32>
    %73 = vector.broadcast %72 : f32 to vector<1x1xf32>
    %cst_42 = arith.constant 1.280000e+02 : f32
    %74 = vector.broadcast %cst_42 : f32 to vector<1x1xf32>
    %75 = arith.divf %73, %74 : vector<1x1xf32>
    %cst_43 = arith.constant 1.1920929E-7 : f32
    %76 = vector.broadcast %cst_43 : f32 to vector<1x1xf32>
    %77 = arith.addf %75, %76 : vector<1x1xf32>
    %78 = math.rsqrt %77 : vector<1x1xf32>
    %79 = vector.broadcast %78 : vector<1x1xf32> to vector<4x32xf32>
    %80 = arith.mulf %67, %79 : vector<4x32xf32>
    %c0_44 = arith.constant 0 : index
    %c0_45 = arith.constant 0 : index
    %c0_46 = arith.constant 0 : index
    %81 = vector.load %arg14[%c0_44, %c0_45, %c0_46] : memref<1x4x32xf32, #tpu.memory_space<vmem>>, vector<1x4x32xf32>
    %82 = vector.shape_cast %81 : vector<1x4x32xf32> to vector<4x32xf32>
    %83 = arith.mulf %80, %82 : vector<4x32xf32>
    %c0_47 = arith.constant 0 : index
    %c0_48 = arith.constant 0 : index
    %c0_49 = arith.constant 0 : index
    %84 = vector.load %arg15[%c0_47, %c0_48, %c0_49] : memref<1x4x4xf32, #tpu.memory_space<vmem>>, vector<1x4x4xf32>
    %85 = vector.shape_cast %84 : vector<1x4x4xf32> to vector<4x4xf32>
    %cst_50 = arith.constant dense<0.000000e+00> : vector<4x32xf32>
    %86 = tpu.matmul %85, %83, %cst_50 {dimension_numbers = #tpu.dot_dimension_numbers<[1], [0], [0], [1], [0, 0, 1, 1], [], []>} : vector<4x4xf32>, vector<4x32xf32>, vector<4x32xf32> -> vector<4x32xf32>
    %c0_51 = arith.constant 0 : index
    %c0_52 = arith.constant 0 : index
    %c0_53 = arith.constant 0 : index
    %87 = vector.load %arg16[%c0_51, %c0_52, %c0_53] : memref<1x4x1xf32, #tpu.memory_space<vmem>>, vector<1x4x1xf32>
    %88 = vector.shape_cast %87 : vector<1x4x1xf32> to vector<4x1xf32>
    %89 = vector.broadcast %88 : vector<4x1xf32> to vector<4x32xf32>
    %90 = arith.addf %86, %89 : vector<4x32xf32>
    %cst_54 = arith.constant 0.000000e+00 : f32
    %91 = vector.broadcast %cst_54 : f32 to vector<4x32xf32>
    %92 = arith.maximumf %90, %91 : vector<4x32xf32>
    %93 = arith.addf %67, %92 : vector<4x32xf32>
    %94 = arith.mulf %93, %93 : vector<4x32xf32>
    %95 = vector.shape_cast %94 : vector<4x32xf32> to vector<1x4x32xf32>
    %cst_55 = arith.constant dense<0.000000e+00> : vector<1xf32>
    %96 = vector.multi_reduction <add>, %95, %cst_55 [1, 2] : vector<1x4x32xf32> to vector<1xf32>
    %97 = vector.shape_cast %96 : vector<1xf32> to vector<1x1x1xf32>
    %98 = vector.extract %97[0, 0, 0] : f32 from vector<1x1x1xf32>
    %99 = vector.broadcast %98 : f32 to vector<1x1xf32>
    %cst_56 = arith.constant 1.280000e+02 : f32
    %100 = vector.broadcast %cst_56 : f32 to vector<1x1xf32>
    %101 = arith.divf %99, %100 : vector<1x1xf32>
    %cst_57 = arith.constant 1.1920929E-7 : f32
    %102 = vector.broadcast %cst_57 : f32 to vector<1x1xf32>
    %103 = arith.addf %101, %102 : vector<1x1xf32>
    %104 = math.rsqrt %103 : vector<1x1xf32>
    %105 = vector.broadcast %104 : vector<1x1xf32> to vector<4x32xf32>
    %106 = arith.mulf %93, %105 : vector<4x32xf32>
    %c0_58 = arith.constant 0 : index
    %c0_59 = arith.constant 0 : index
    %c0_60 = arith.constant 0 : index
    %107 = vector.load %arg17[%c0_58, %c0_59, %c0_60] : memref<1x4x32xf32, #tpu.memory_space<vmem>>, vector<1x4x32xf32>
    %108 = vector.shape_cast %107 : vector<1x4x32xf32> to vector<4x32xf32>
    %109 = arith.mulf %106, %108 : vector<4x32xf32>
    %c0_61 = arith.constant 0 : index
    %c0_62 = arith.constant 0 : index
    %c0_63 = arith.constant 0 : index
    %110 = vector.load %arg18[%c0_61, %c0_62, %c0_63] : memref<1x32x32xf32, #tpu.memory_space<vmem>>, vector<1x32x32xf32>
    %111 = vector.shape_cast %110 : vector<1x32x32xf32> to vector<32x32xf32>
    %cst_64 = arith.constant dense<0.000000e+00> : vector<4x32xf32>
    %112 = tpu.matmul %109, %111, %cst_64 {dimension_numbers = #tpu.dot_dimension_numbers<[1], [0], [0], [1], [0, 0, 1, 1], [], []>} : vector<4x32xf32>, vector<32x32xf32>, vector<4x32xf32> -> vector<4x32xf32>
    %c0_65 = arith.constant 0 : index
    %c0_66 = arith.constant 0 : index
    %c0_67 = arith.constant 0 : index
    %113 = vector.load %arg19[%c0_65, %c0_66, %c0_67] : memref<1x1x32xf32, #tpu.memory_space<vmem>>, vector<1x1x32xf32>
    %114 = vector.shape_cast %113 : vector<1x1x32xf32> to vector<1x32xf32>
    %115 = vector.broadcast %114 : vector<1x32xf32> to vector<4x32xf32>
    %116 = arith.addf %112, %115 : vector<4x32xf32>
    %cst_68 = arith.constant 0.000000e+00 : f32
    %117 = vector.broadcast %cst_68 : f32 to vector<4x32xf32>
    %118 = arith.maximumf %116, %117 : vector<4x32xf32>
    %119 = arith.addf %93, %118 : vector<4x32xf32>
    %120 = arith.addf %67, %119 : vector<4x32xf32>
    %121 = arith.mulf %120, %120 : vector<4x32xf32>
    %122 = vector.shape_cast %121 : vector<4x32xf32> to vector<1x4x32xf32>
    %cst_69 = arith.constant dense<0.000000e+00> : vector<1xf32>
    %123 = vector.multi_reduction <add>, %122, %cst_69 [1, 2] : vector<1x4x32xf32> to vector<1xf32>
    %124 = vector.shape_cast %123 : vector<1xf32> to vector<1x1x1xf32>
    %125 = vector.extract %124[0, 0, 0] : f32 from vector<1x1x1xf32>
    %126 = vector.broadcast %125 : f32 to vector<1x1xf32>
    %cst_70 = arith.constant 1.280000e+02 : f32
    %127 = vector.broadcast %cst_70 : f32 to vector<1x1xf32>
    %128 = arith.divf %126, %127 : vector<1x1xf32>
    %cst_71 = arith.constant 1.1920929E-7 : f32
    %129 = vector.broadcast %cst_71 : f32 to vector<1x1xf32>
    %130 = arith.addf %128, %129 : vector<1x1xf32>
    %131 = math.rsqrt %130 : vector<1x1xf32>
    %132 = vector.broadcast %131 : vector<1x1xf32> to vector<4x32xf32>
    %133 = arith.mulf %120, %132 : vector<4x32xf32>
    %c0_72 = arith.constant 0 : index
    %c0_73 = arith.constant 0 : index
    %134 = vector.load %arg20[%c0_72, %c0_73] : memref<4x32xf32, #tpu.memory_space<vmem>>, vector<4x32xf32>
    %135 = arith.mulf %133, %134 : vector<4x32xf32>
    %c0_74 = arith.constant 0 : index
    %c0_75 = arith.constant 0 : index
    %136 = vector.load %arg21[%c0_74, %c0_75] : memref<4x4xf32, #tpu.memory_space<vmem>>, vector<4x4xf32>
    %cst_76 = arith.constant dense<0.000000e+00> : vector<4x32xf32>
    %137 = tpu.matmul %136, %135, %cst_76 {dimension_numbers = #tpu.dot_dimension_numbers<[1], [0], [0], [1], [0, 0, 1, 1], [], []>} : vector<4x4xf32>, vector<4x32xf32>, vector<4x32xf32> -> vector<4x32xf32>
    %c0_77 = arith.constant 0 : index
    %c0_78 = arith.constant 0 : index
    %138 = vector.load %arg22[%c0_77, %c0_78] : memref<4x1xf32, #tpu.memory_space<vmem>>, vector<4x1xf32>
    %139 = vector.broadcast %138 : vector<4x1xf32> to vector<4x32xf32>
    %140 = arith.addf %137, %139 : vector<4x32xf32>
    %cst_79 = arith.constant 0.000000e+00 : f32
    %141 = vector.broadcast %cst_79 : f32 to vector<4x32xf32>
    %142 = arith.maximumf %140, %141 : vector<4x32xf32>
    %143 = arith.addf %120, %142 : vector<4x32xf32>
    %144 = arith.mulf %143, %143 : vector<4x32xf32>
    %145 = vector.shape_cast %144 : vector<4x32xf32> to vector<1x4x32xf32>
    %cst_80 = arith.constant dense<0.000000e+00> : vector<1xf32>
    %146 = vector.multi_reduction <add>, %145, %cst_80 [1, 2] : vector<1x4x32xf32> to vector<1xf32>
    %147 = vector.shape_cast %146 : vector<1xf32> to vector<1x1x1xf32>
    %148 = vector.extract %147[0, 0, 0] : f32 from vector<1x1x1xf32>
    %149 = vector.broadcast %148 : f32 to vector<1x1xf32>
    %cst_81 = arith.constant 1.280000e+02 : f32
    %150 = vector.broadcast %cst_81 : f32 to vector<1x1xf32>
    %151 = arith.divf %149, %150 : vector<1x1xf32>
    %cst_82 = arith.constant 1.1920929E-7 : f32
    %152 = vector.broadcast %cst_82 : f32 to vector<1x1xf32>
    %153 = arith.addf %151, %152 : vector<1x1xf32>
    %154 = math.rsqrt %153 : vector<1x1xf32>
    %155 = vector.broadcast %154 : vector<1x1xf32> to vector<4x32xf32>
    %156 = arith.mulf %143, %155 : vector<4x32xf32>
    %c0_83 = arith.constant 0 : index
    %c0_84 = arith.constant 0 : index
    %157 = vector.load %arg23[%c0_83, %c0_84] : memref<4x32xf32, #tpu.memory_space<vmem>>, vector<4x32xf32>
    %158 = arith.mulf %156, %157 : vector<4x32xf32>
    %c0_85 = arith.constant 0 : index
    %c0_86 = arith.constant 0 : index
    %159 = vector.load %arg24[%c0_85, %c0_86] : memref<32x16xf32, #tpu.memory_space<vmem>>, vector<32x16xf32>
    %cst_87 = arith.constant dense<0.000000e+00> : vector<4x16xf32>
    %160 = tpu.matmul %158, %159, %cst_87 {dimension_numbers = #tpu.dot_dimension_numbers<[1], [0], [0], [1], [0, 0, 1, 1], [], []>} : vector<4x32xf32>, vector<32x16xf32>, vector<4x16xf32> -> vector<4x16xf32>
    %c0_88 = arith.constant 0 : index
    %c0_89 = arith.constant 0 : index
    %161 = vector.load %arg25[%c0_88, %c0_89] : memref<1x16xf32, #tpu.memory_space<vmem>>, vector<1x16xf32>
    %162 = vector.broadcast %161 : vector<1x16xf32> to vector<4x16xf32>
    %163 = arith.addf %160, %162 : vector<4x16xf32>
    %c0_90 = arith.constant 0 : index
    %c0_91 = arith.constant 0 : index
    %164 = vector.load %arg29[%c0_90, %c0_91] : memref<1x16xf32, #tpu.memory_space<vmem>>, vector<1x16xf32>
    %165 = vector.broadcast %164 : vector<1x16xf32> to vector<4x16xf32>
    %166 = arith.mulf %163, %165 : vector<4x16xf32>
    %c0_92 = arith.constant 0 : index
    %c0_93 = arith.constant 0 : index
    %c0_94 = arith.constant 0 : index
    %167 = vector.load %arg28[%c0_92, %c0_93, %c0_94] : memref<9x4x16xf32, #tpu.memory_space<vmem>>, vector<9x4x16xf32>
    %168 = vector.shape_cast %166 : vector<4x16xf32> to vector<1x4x16xf32>
    %169 = vector.broadcast %168 : vector<1x4x16xf32> to vector<9x4x16xf32>
    %170 = arith.mulf %167, %169 : vector<9x4x16xf32>
    %cst_95 = arith.constant dense<0.000000e+00> : vector<9x4xf32>
    %171 = vector.multi_reduction <add>, %170, %cst_95 [2] : vector<9x4x16xf32> to vector<9x4xf32>
    %c0_96 = arith.constant 0 : index
    %c0_97 = arith.constant 0 : index
    %c0_98 = arith.constant 0 : index
    %172 = vector.load %arg4[%c0_96, %c0_97, %c0_98] : memref<1x8x1xf32, #tpu.memory_space<vmem>>, vector<1x8x1xf32>
    %173 = vector.shape_cast %172 : vector<1x8x1xf32> to vector<8x1xf32>
    %c0_99 = arith.constant 0 : index
    %c0_100 = arith.constant 0 : index
    %174 = vector.load %arg26[%c0_99, %c0_100] : memref<1x9xf32, #tpu.memory_space<vmem>>, vector<1x9xf32>
    %175 = vector.broadcast %173 : vector<8x1xf32> to vector<8x9xf32>
    %176 = vector.broadcast %174 : vector<1x9xf32> to vector<8x9xf32>
    %177 = arith.mulf %175, %176 : vector<8x9xf32>
    %c0_101 = arith.constant 0 : index
    %c0_102 = arith.constant 0 : index
    %178 = vector.load %arg27[%c0_101, %c0_102] : memref<1x9xf32, #tpu.memory_space<vmem>>, vector<1x9xf32>
    %179 = vector.broadcast %178 : vector<1x9xf32> to vector<8x9xf32>
    %180 = arith.addf %177, %179 : vector<8x9xf32>
    %cst_103 = arith.constant 0.000000e+00 : f32
    %181 = vector.broadcast %cst_103 : f32 to vector<8x9xf32>
    %182 = arith.maximumf %180, %181 : vector<8x9xf32>
    %cst_104 = arith.constant dense<0.000000e+00> : vector<8x4xf32>
    %183 = tpu.matmul %182, %171, %cst_104 {dimension_numbers = #tpu.dot_dimension_numbers<[1], [0], [0], [1], [0, 0, 1, 1], [], []>} : vector<8x9xf32>, vector<9x4xf32>, vector<8x4xf32> -> vector<8x4xf32>
    %c0_105 = arith.constant 0 : index
    %c0_106 = arith.constant 0 : index
    %184 = vector.load %arg30[%c0_105, %c0_106] : memref<1x1xf32, #tpu.memory_space<vmem>>, vector<1x1xf32>
    %185 = vector.broadcast %184 : vector<1x1xf32> to vector<8x4xf32>
    %186 = arith.addf %183, %185 : vector<8x4xf32>
    %c0_107 = arith.constant 0 : index
    %c0_108 = arith.constant 0 : index
    %c0_109 = arith.constant 0 : index
    %187 = vector.load %arg31[%c0_107, %c0_108, %c0_109] : memref<1x8x4xf32, #tpu.memory_space<vmem>>, vector<1x8x4xf32>
    %188 = vector.shape_cast %187 : vector<1x8x4xf32> to vector<8x4xf32>
    %189 = vector.shape_cast %186 : vector<8x4xf32> to vector<1x8x4xf32>
    tpu.vector_store %arg31[%c0_107, %c0_108, %c0_109], %189 {strides = array<i32>} : memref<1x8x4xf32, #tpu.memory_space<vmem>>, vector<1x8x4xf32>,
    return
  }
  func.func @transform_0(%arg0: i32) -> (i32, i32, i32) {
    %c0_i32 = arith.constant 0 : i32
    %c0_i32_0 = arith.constant 0 : i32
    %c0_i32_1 = arith.constant 0 : i32
    return %arg0, %c0_i32, %c0_i32_0 : i32, i32, i32
  }
  func.func @transform_1(%arg0: i32) -> (i32, i32, i32) {
    %c0_i32 = arith.constant 0 : i32
    %c0_i32_0 = arith.constant 0 : i32
    %c0_i32_1 = arith.constant 0 : i32
    return %arg0, %c0_i32, %c0_i32_0 : i32, i32, i32
  }
  func.func @transform_2(%arg0: i32) -> (i32, i32, i32) {
    %c0_i32 = arith.constant 0 : i32
    %c0_i32_0 = arith.constant 0 : i32
    %c0_i32_1 = arith.constant 0 : i32
    return %arg0, %c0_i32, %c0_i32_0 : i32, i32, i32
  }
  func.func @transform_3(%arg0: i32) -> (i32, i32, i32) {
    %c0_i32 = arith.constant 0 : i32
    %c0_i32_0 = arith.constant 0 : i32
    %c0_i32_1 = arith.constant 0 : i32
    return %arg0, %c0_i32, %c0_i32_0 : i32, i32, i32
  }
  func.func @transform_4(%arg0: i32) -> (i32, i32) {
    %c0_i32 = arith.constant 0 : i32
    %c0_i32_0 = arith.constant 0 : i32
    %c0_i32_1 = arith.constant 0 : i32
    return %c0_i32, %c0_i32_0 : i32, i32
  }
  func.func @transform_5(%arg0: i32) -> (i32, i32) {
    %c0_i32 = arith.constant 0 : i32
    %c0_i32_0 = arith.constant 0 : i32
    %c0_i32_1 = arith.constant 0 : i32
    return %c0_i32, %c0_i32_0 : i32, i32
  }
  func.func @transform_6(%arg0: i32) -> (i32, i32) {
    %c0_i32 = arith.constant 0 : i32
    %c0_i32_0 = arith.constant 0 : i32
    %c0_i32_1 = arith.constant 0 : i32
    return %c0_i32, %c0_i32_0 : i32, i32
  }
  func.func @transform_7(%arg0: i32) -> (i32, i32) {
    %c0_i32 = arith.constant 0 : i32
    %c0_i32_0 = arith.constant 0 : i32
    %c0_i32_1 = arith.constant 0 : i32
    return %c0_i32, %c0_i32_0 : i32, i32
  }
  func.func @transform_8(%arg0: i32) -> (i32, i32) {
    %c0_i32 = arith.constant 0 : i32
    %c0_i32_0 = arith.constant 0 : i32
    %c0_i32_1 = arith.constant 0 : i32
    return %c0_i32, %c0_i32_0 : i32, i32
  }
  func.func @transform_9(%arg0: i32) -> (i32, i32) {
    %c0_i32 = arith.constant 0 : i32
    %c0_i32_0 = arith.constant 0 : i32
    %c0_i32_1 = arith.constant 0 : i32
    return %c0_i32, %c0_i32_0 : i32, i32
  }
  func.func @transform_10(%arg0: i32) -> (i32, i32) {
    %c0_i32 = arith.constant 0 : i32
    %c0_i32_0 = arith.constant 0 : i32
    %c0_i32_1 = arith.constant 0 : i32
    return %c0_i32, %c0_i32_0 : i32, i32
  }
  func.func @transform_11(%arg0: i32) -> (i32, i32) {
    %c0_i32 = arith.constant 0 : i32
    %c0_i32_0 = arith.constant 0 : i32
    %c0_i32_1 = arith.constant 0 : i32
    return %c0_i32, %c0_i32_0 : i32, i32
  }
  func.func @transform_12(%arg0: i32) -> (i32, i32) {
    %c0_i32 = arith.constant 0 : i32
    %c0_i32_0 = arith.constant 0 : i32
    %c0_i32_1 = arith.constant 0 : i32
    return %c0_i32, %c0_i32_0 : i32, i32
  }
  func.func @transform_13(%arg0: i32) -> (i32, i32, i32) {
    %c0_i32 = arith.constant 0 : i32
    %c0_i32_0 = arith.constant 0 : i32
    %c0_i32_1 = arith.constant 0 : i32
    %c0_i32_2 = arith.constant 0 : i32
    return %c0_i32, %c0_i32_0, %c0_i32_1 : i32, i32, i32
  }
  func.func @transform_14(%arg0: i32) -> (i32, i32, i32) {
    %c0_i32 = arith.constant 0 : i32
    %c0_i32_0 = arith.constant 0 : i32
    %c0_i32_1 = arith.constant 0 : i32
    %c0_i32_2 = arith.constant 0 : i32
    return %c0_i32, %c0_i32_0, %c0_i32_1 : i32, i32, i32
  }
  func.func @transform_15(%arg0: i32) -> (i32, i32, i32) {
    %c0_i32 = arith.constant 0 : i32
    %c0_i32_0 = arith.constant 0 : i32
    %c0_i32_1 = arith.constant 0 : i32
    %c0_i32_2 = arith.constant 0 : i32
    return %c0_i32, %c0_i32_0, %c0_i32_1 : i32, i32, i32
  }
  func.func @transform_16(%arg0: i32) -> (i32, i32, i32) {
    %c0_i32 = arith.constant 0 : i32
    %c0_i32_0 = arith.constant 0 : i32
    %c0_i32_1 = arith.constant 0 : i32
    %c0_i32_2 = arith.constant 0 : i32
    return %c0_i32, %c0_i32_0, %c0_i32_1 : i32, i32, i32
  }
  func.func @transform_17(%arg0: i32) -> (i32, i32, i32) {
    %c0_i32 = arith.constant 0 : i32
    %c0_i32_0 = arith.constant 0 : i32
    %c0_i32_1 = arith.constant 0 : i32
    %c0_i32_2 = arith.constant 0 : i32
    return %c0_i32, %c0_i32_0, %c0_i32_1 : i32, i32, i32
  }
  func.func @transform_18(%arg0: i32) -> (i32, i32, i32) {
    %c0_i32 = arith.constant 0 : i32
    %c0_i32_0 = arith.constant 0 : i32
    %c0_i32_1 = arith.constant 0 : i32
    %c0_i32_2 = arith.constant 0 : i32
    return %c0_i32, %c0_i32_0, %c0_i32_1 : i32, i32, i32
  }
  func.func @transform_19(%arg0: i32) -> (i32, i32) {
    %c0_i32 = arith.constant 0 : i32
    %c0_i32_0 = arith.constant 0 : i32
    %c0_i32_1 = arith.constant 0 : i32
    return %c0_i32, %c0_i32_0 : i32, i32
  }
  func.func @transform_20(%arg0: i32) -> (i32, i32) {
    %c0_i32 = arith.constant 0 : i32
    %c0_i32_0 = arith.constant 0 : i32
    %c0_i32_1 = arith.constant 0 : i32
    return %c0_i32, %c0_i32_0 : i32, i32
  }
  func.func @transform_21(%arg0: i32) -> (i32, i32) {
    %c0_i32 = arith.constant 0 : i32
    %c0_i32_0 = arith.constant 0 : i32
    %c0_i32_1 = arith.constant 0 : i32
    return %c0_i32, %c0_i32_0 : i32, i32
  }
  func.func @transform_22(%arg0: i32) -> (i32, i32) {
    %c0_i32 = arith.constant 0 : i32
    %c0_i32_0 = arith.constant 0 : i32
    %c0_i32_1 = arith.constant 0 : i32
    return %c0_i32, %c0_i32_0 : i32, i32
  }
  func.func @transform_23(%arg0: i32) -> (i32, i32) {
    %c0_i32 = arith.constant 0 : i32
    %c0_i32_0 = arith.constant 0 : i32
    %c0_i32_1 = arith.constant 0 : i32
    return %c0_i32, %c0_i32_0 : i32, i32
  }
  func.func @transform_24(%arg0: i32) -> (i32, i32) {
    %c0_i32 = arith.constant 0 : i32
    %c0_i32_0 = arith.constant 0 : i32
    %c0_i32_1 = arith.constant 0 : i32
    return %c0_i32, %c0_i32_0 : i32, i32
  }
  func.func @transform_25(%arg0: i32) -> (i32, i32) {
    %c0_i32 = arith.constant 0 : i32
    %c0_i32_0 = arith.constant 0 : i32
    %c0_i32_1 = arith.constant 0 : i32
    return %c0_i32, %c0_i32_0 : i32, i32
  }
  func.func @transform_26(%arg0: i32) -> (i32, i32) {
    %c0_i32 = arith.constant 0 : i32
    %c0_i32_0 = arith.constant 0 : i32
    %c0_i32_1 = arith.constant 0 : i32
    return %c0_i32, %c0_i32_0 : i32, i32
  }
  func.func @transform_27(%arg0: i32) -> (i32, i32, i32) {
    %c0_i32 = arith.constant 0 : i32
    %c0_i32_0 = arith.constant 0 : i32
    %c0_i32_1 = arith.constant 0 : i32
    %c0_i32_2 = arith.constant 0 : i32
    return %c0_i32, %c0_i32_0, %c0_i32_1 : i32, i32, i32
  }
  func.func @transform_28(%arg0: i32) -> (i32, i32) {
    %c0_i32 = arith.constant 0 : i32
    %c0_i32_0 = arith.constant 0 : i32
    %c0_i32_1 = arith.constant 0 : i32
    return %c0_i32, %c0_i32_0 : i32, i32
  }
  func.func @transform_29(%arg0: i32) -> (i32, i32) {
    %c0_i32 = arith.constant 0 : i32
    %c0_i32_0 = arith.constant 0 : i32
    %c0_i32_1 = arith.constant 0 : i32
    return %c0_i32, %c0_i32_0 : i32, i32
  }
  func.func @transform_30(%arg0: i32) -> (i32, i32, i32) {
    %c0_i32 = arith.constant 0 : i32
    %c0_i32_0 = arith.constant 0 : i32
    %c0_i32_1 = arith.constant 0 : i32
    return %arg0, %c0_i32, %c0_i32_0 : i32, i32, i32
  }
}

</mosaic_0001>

<llo_original>
// kernel: tpu_custom_call.1
$region0: #{tpu_custom_call.1}
  #allocation0 [shape = 'u32[]', space=smem, size = 0x4, offset = 0x4, fixed_abs, tag = 'smem constant byte address 0x4 - core index']
  #allocation1 [shape = 'u32[144,128]{1,0:T(1,128)}', space=vmem, size = 0x12000, scoped, tag = 'internal scratch']
  #allocation2 [shape = 'f32[1,1]{1,0:T(1,128)S(1)}', space=vmem, size = 0x200, scoped, tag = 'scoped memory for tpu_custom_call.1']
  %s0 = inlined_call_operand.smem [shape: u32[31], index: -1, kind: input, shape index: {}]
  %s1 = sld [smem:[%s0]]
  %s2 = scalar_lea.smem %s0, 1
  %s3 = sld [smem:[%s2]]
  %s4 = scalar_lea.smem %s0, 2
  %s5 = sld [smem:[%s4]]
  %s6 = scalar_lea.smem %s0, 3
  %s7 = sld [smem:[%s6]]
  %s8 = scalar_lea.smem %s0, 4
  %s9 = sld [smem:[%s8]]
  %s10 = scalar_lea.smem %s0, 5
  %s11 = sld [smem:[%s10]]
  %s12 = scalar_lea.smem %s0, 6
  %s13 = sld [smem:[%s12]]
  %s14 = scalar_lea.smem %s0, 7
  %s15 = sld [smem:[%s14]]
  %s16 = scalar_lea.smem %s0, 8
  %s17 = sld [smem:[%s16]]
  %s18 = scalar_lea.smem %s0, 9
  %s19 = sld [smem:[%s18]]
  %s20 = scalar_lea.smem %s0, 10
  %s21 = sld [smem:[%s20]]
  %s22 = scalar_lea.smem %s0, 11
  %s23 = sld [smem:[%s22]]
  %s24 = scalar_lea.smem %s0, 12
  %s25 = sld [smem:[%s24]]
  %s26 = scalar_lea.smem %s0, 13
  %s27 = sld [smem:[%s26]]
  %s28 = scalar_lea.smem %s0, 14
  %s29 = sld [smem:[%s28]]
  %s30 = scalar_lea.smem %s0, 15
  %s31 = sld [smem:[%s30]]
  %s32 = scalar_lea.smem %s0, 16
  %s33 = sld [smem:[%s32]]
  %s34 = scalar_lea.smem %s0, 17
  %s35 = sld [smem:[%s34]]
  %s36 = scalar_lea.smem %s0, 18
  %s37 = sld [smem:[%s36]]
  %s38 = scalar_lea.smem %s0, 19
  %s39 = sld [smem:[%s38]]
  %s40 = scalar_lea.smem %s0, 20
  %s41 = sld [smem:[%s40]]
  %s42 = scalar_lea.smem %s0, 21
  %s43 = sld [smem:[%s42]]
  %s44 = scalar_lea.smem %s0, 22
  %s45 = sld [smem:[%s44]]
  %s46 = scalar_lea.smem %s0, 23
  %s47 = sld [smem:[%s46]]
  %s48 = scalar_lea.smem %s0, 24
  %s49 = sld [smem:[%s48]]
  %s50 = scalar_lea.smem %s0, 25
  %s51 = sld [smem:[%s50]]
  %s52 = scalar_lea.smem %s0, 26
  %s53 = sld [smem:[%s52]]
  %s54 = scalar_lea.smem %s0, 27
  %s55 = sld [smem:[%s54]]
  %s56 = scalar_lea.smem %s0, 28
  %s57 = sld [smem:[%s56]]
  %s58 = scalar_lea.smem %s0, 29
  %s59 = sld [smem:[%s58]]
  %s60 = scalar_lea.smem %s0, 30
  %s61 = sld [smem:[%s60]]
  %s62 = sld [smem:[#allocation0]]
  $region153: #{tpu_custom_call.1} parent=0
    _
  %s64 = ssub.s32 1, %s62
  %s65 = scalar_select 0, %s64, %s62
  %v66 = vstv %s59
  %67 = vst [vmem:[#allocation2] sm:$0x1] %v66
  loop: start=0, step=1, limit=4
  $region2: #{tpu_custom_call.1} parent=0 // loop_pre_header
    _
  $region3: #{tpu_custom_call.1} parent=0 // loop_header
    %s69 = sphi 0, %s73
    %p70 = scmp.ge.s32.totalorder %s69, 4
    %s79 = sphi 0, %s81
    %s82 = sphi 0, %s79
    %s83 = sphi 0, %s82
    %s99 = sphi 0, %s83
    %s105 = sphi 0, %s107
    %s108 = sphi 0, %s105
    %s109 = sphi 0, %s108
    %s125 = sphi 0, %s109
    %s131 = sphi 0, %s133
    %s134 = sphi 0, %s131
    %s135 = sphi 0, %s134
    %s151 = sphi 0, %s135
    %s157 = sphi 0, %s159
    %s160 = sphi 0, %s157
    %s161 = sphi 0, %s160
    %s177 = sphi 0, %s161
    %s181 = sphi 0, %s181
    %s183 = sphi 0, %s181
    %s184 = sphi 0, %s183
    %s198 = sphi 0, %s184
    %s202 = sphi 0, %s202
    %s204 = sphi 0, %s202
    %s205 = sphi 0, %s204
    %s219 = sphi 0, %s205
    %s223 = sphi 0, %s223
    %s225 = sphi 0, %s223
    %s226 = sphi 0, %s225
    %s240 = sphi 0, %s226
    %s244 = sphi 0, %s244
    %s246 = sphi 0, %s244
    %s247 = sphi 0, %s246
    %s261 = sphi 0, %s247
    %s265 = sphi 0, %s265
    %s267 = sphi 0, %s265
    %s268 = sphi 0, %s267
    %s282 = sphi 0, %s268
    %s286 = sphi 0, %s286
    %s288 = sphi 0, %s286
    %s289 = sphi 0, %s288
    %s303 = sphi 0, %s289
    %s307 = sphi 0, %s307
    %s309 = sphi 0, %s307
    %s310 = sphi 0, %s309
    %s324 = sphi 0, %s310
    %s328 = sphi 0, %s328
    %s330 = sphi 0, %s328
    %s331 = sphi 0, %s330
    %s345 = sphi 0, %s331
    %s349 = sphi 0, %s349
    %s351 = sphi 0, %s349
    %s352 = sphi 0, %s351
    %s366 = sphi 0, %s352
    %s370 = sphi 0, %s370
    %s372 = sphi 0, %s370
    %s373 = sphi 0, %s372
    %s387 = sphi 0, %s373
    %s391 = sphi 0, %s391
    %s393 = sphi 0, %s391
    %s394 = sphi 0, %s393
    %s408 = sphi 0, %s394
    %s412 = sphi 0, %s412
    %s414 = sphi 0, %s412
    %s415 = sphi 0, %s414
    %s429 = sphi 0, %s415
    %s433 = sphi 0, %s433
    %s435 = sphi 0, %s433
    %s436 = sphi 0, %s435
    %s450 = sphi 0, %s436
    %s454 = sphi 0, %s454
    %s456 = sphi 0, %s454
    %s457 = sphi 0, %s456
    %s471 = sphi 0, %s457
    %s475 = sphi 0, %s475
    %s477 = sphi 0, %s475
    %s478 = sphi 0, %s477
    %s492 = sphi 0, %s478
    %s496 = sphi 0, %s496
    %s498 = sphi 0, %s496
    %s499 = sphi 0, %s498
    %s513 = sphi 0, %s499
    %s517 = sphi 0, %s517
    %s519 = sphi 0, %s517
    %s520 = sphi 0, %s519
    %s534 = sphi 0, %s520
    %s538 = sphi 0, %s538
    %s540 = sphi 0, %s538
    %s541 = sphi 0, %s540
    %s555 = sphi 0, %s541
    %s559 = sphi 0, %s559
    %s561 = sphi 0, %s559
    %s562 = sphi 0, %s561
    %s576 = sphi 0, %s562
    %s580 = sphi 0, %s580
    %s582 = sphi 0, %s580
    %s583 = sphi 0, %s582
    %s597 = sphi 0, %s583
    %s601 = sphi 0, %s601
    %s603 = sphi 0, %s601
    %s604 = sphi 0, %s603
    %s618 = sphi 0, %s604
    %s622 = sphi 0, %s622
    %s624 = sphi 0, %s622
    %s625 = sphi 0, %s624
    %s639 = sphi 0, %s625
    %s643 = sphi 0, %s643
    %s645 = sphi 0, %s643
    %s646 = sphi 0, %s645
    %s660 = sphi 0, %s646
    %s664 = sphi 0, %s664
    %s666 = sphi 0, %s664
    %s667 = sphi 0, %s666
    %s681 = sphi 0, %s667
    %s685 = sphi 0, %s685
    %s687 = sphi 0, %s685
    %s688 = sphi 0, %s687
    %s702 = sphi 0, %s688
    %s706 = sphi 0, %s706
    %s708 = sphi 0, %s706
    %s709 = sphi 0, %s708
    %s723 = sphi 0, %s709
    %s729 = sphi 0, %s731
    %s732 = sphi 0, %s729
    %s733 = sphi 0, %s732
    %s749 = sphi 0, %s733
  $region4: #{tpu_custom_call.1} parent=0 // loop_header_branch
    %72 = sbr.rel (%p70) target = $region8
  $region5: #{tpu_custom_call.1} parent=0 // loop_body
    %s74 = ssub.s32 %s69, 1
    %s75 = ssub.s32 %s69, 2
    %s76 = sadd.s32 %s69, 1
    %s77 = ssub.s32 %s69, %s76
    %p78 = scmp.eq.s32.totalorder %s77, 0
    %s80 = sadd.s32 %s79, 1
    %s81 = scalar_select %p78, %s79, %s80
    %p84 = pneg %p78
    %p85 = scmp.eq.s32.totalorder %s69, 1
    %p86 = por %p84, %p85
    %p87 = scmp.ne.s32.totalorder %s79, %s82
    %p88 = scmp.eq.s32.totalorder %s69, 0
    %p89 = por %p87, %p88
    %p90 = scmp.ne.s32.totalorder %s79, %s82
    %p91 = scmp.eq.s32.totalorder %s74, 1
    %p92 = por %p90, %p91
    %p93 = scmp.ne.s32.totalorder %s82, %s83
    %p94 = scmp.eq.s32.totalorder %s74, 0
    %p95 = por %p93, %p94
    %p96 = scmp.ne.s32.totalorder %s82, %s83
    %p97 = scmp.eq.s32.totalorder %s75, 1
    %p98 = por %p96, %p97
    %p100 = scmp.ne.s32.totalorder %s83, %s99
    %p101 = scmp.eq.s32.totalorder %s75, 0
    %p102 = por %p100, %p101
    %s103 = ssub.s32 %s69, %s76
    %p104 = scmp.eq.s32.totalorder %s103, 0
    %s106 = sadd.s32 %s105, 1
    %s107 = scalar_select %p104, %s105, %s106
    %p110 = pneg %p104
    %p111 = scmp.eq.s32.totalorder %s69, 1
    %p112 = por %p110, %p111
    %p113 = scmp.ne.s32.totalorder %s105, %s108
    %p114 = scmp.eq.s32.totalorder %s69, 0
    %p115 = por %p113, %p114
    %p116 = scmp.ne.s32.totalorder %s105, %s108
    %p117 = scmp.eq.s32.totalorder %s74, 1
    %p118 = por %p116, %p117
    %p119 = scmp.ne.s32.totalorder %s108, %s109
    %p120 = scmp.eq.s32.totalorder %s74, 0
    %p121 = por %p119, %p120
    %p122 = scmp.ne.s32.totalorder %s108, %s109
    %p123 = scmp.eq.s32.totalorder %s75, 1
    %p124 = por %p122, %p123
    %p126 = scmp.ne.s32.totalorder %s109, %s125
    %p127 = scmp.eq.s32.totalorder %s75, 0
    %p128 = por %p126, %p127
    %s129 = ssub.s32 %s69, %s76
    %p130 = scmp.eq.s32.totalorder %s129, 0
    %s132 = sadd.s32 %s131, 1
    %s133 = scalar_select %p130, %s131, %s132
    %p136 = pneg %p130
    %p137 = scmp.eq.s32.totalorder %s69, 1
    %p138 = por %p136, %p137
    %p139 = scmp.ne.s32.totalorder %s131, %s134
    %p140 = scmp.eq.s32.totalorder %s69, 0
    %p141 = por %p139, %p140
    %p142 = scmp.ne.s32.totalorder %s131, %s134
    %p143 = scmp.eq.s32.totalorder %s74, 1
    %p144 = por %p142, %p143
    %p145 = scmp.ne.s32.totalorder %s134, %s135
    %p146 = scmp.eq.s32.totalorder %s74, 0
    %p147 = por %p145, %p146
    %p148 = scmp.ne.s32.totalorder %s134, %s135
    %p149 = scmp.eq.s32.totalorder %s75, 1
    %p150 = por %p148, %p149
    %p152 = scmp.ne.s32.totalorder %s135, %s151
    %p153 = scmp.eq.s32.totalorder %s75, 0
    %p154 = por %p152, %p153
    %s155 = ssub.s32 %s69, %s76
    %p156 = scmp.eq.s32.totalorder %s155, 0
    %s158 = sadd.s32 %s157, 1
    %s159 = scalar_select %p156, %s157, %s158
    %p162 = pneg %p156
    %p163 = scmp.eq.s32.totalorder %s69, 1
    %p164 = por %p162, %p163
    %p165 = scmp.ne.s32.totalorder %s157, %s160
    %p166 = scmp.eq.s32.totalorder %s69, 0
    %p167 = por %p165, %p166
    %p168 = scmp.ne.s32.totalorder %s157, %s160
    %p169 = scmp.eq.s32.totalorder %s74, 1
    %p170 = por %p168, %p169
    %p171 = scmp.ne.s32.totalorder %s160, %s161
    %p172 = scmp.eq.s32.totalorder %s74, 0
    %p173 = por %p171, %p172
    %p174 = scmp.ne.s32.totalorder %s160, %s161
    %p175 = scmp.eq.s32.totalorder %s75, 1
    %p176 = por %p174, %p175
    %p178 = scmp.ne.s32.totalorder %s161, %s177
    %p179 = scmp.eq.s32.totalorder %s75, 0
    %p180 = por %p178, %p179
    %s182 = sadd.s32 %s181, 1
    %p185 = scmp.eq.s32.totalorder %s69, 1
    %p186 = scmp.ne.s32.totalorder %s181, %s183
    %p187 = scmp.eq.s32.totalorder %s69, 0
    %p188 = por %p186, %p187
    %p189 = scmp.ne.s32.totalorder %s181, %s183
    %p190 = scmp.eq.s32.totalorder %s74, 1
    %p191 = por %p189, %p190
    %p192 = scmp.ne.s32.totalorder %s183, %s184
    %p193 = scmp.eq.s32.totalorder %s74, 0
    %p194 = por %p192, %p193
    %p195 = scmp.ne.s32.totalorder %s183, %s184
    %p196 = scmp.eq.s32.totalorder %s75, 1
    %p197 = por %p195, %p196
    %p199 = scmp.ne.s32.totalorder %s184, %s198
    %p200 = scmp.eq.s32.totalorder %s75, 0
    %p201 = por %p199, %p200
    %s203 = sadd.s32 %s202, 1
    %p206 = scmp.eq.s32.totalorder %s69, 1
    %p207 = scmp.ne.s32.totalorder %s202, %s204
    %p208 = scmp.eq.s32.totalorder %s69, 0
    %p209 = por %p207, %p208
    %p210 = scmp.ne.s32.totalorder %s202, %s204
    %p211 = scmp.eq.s32.totalorder %s74, 1
    %p212 = por %p210, %p211
    %p213 = scmp.ne.s32.totalorder %s204, %s205
    %p214 = scmp.eq.s32.totalorder %s74, 0
    %p215 = por %p213, %p214
    %p216 = scmp.ne.s32.totalorder %s204, %s205
    %p217 = scmp.eq.s32.totalorder %s75, 1
    %p218 = por %p216, %p217
    %p220 = scmp.ne.s32.totalorder %s205, %s219
    %p221 = scmp.eq.s32.totalorder %s75, 0
    %p222 = por %p220, %p221
    %s224 = sadd.s32 %s223, 1
    %p227 = scmp.eq.s32.totalorder %s69, 1
    %p228 = scmp.ne.s32.totalorder %s223, %s225
    %p229 = scmp.eq.s32.totalorder %s69, 0
    %p230 = por %p228, %p229
    %p231 = scmp.ne.s32.totalorder %s223, %s225
    %p232 = scmp.eq.s32.totalorder %s74, 1
    %p233 = por %p231, %p232
    %p234 = scmp.ne.s32.totalorder %s225, %s226
    %p235 = scmp.eq.s32.totalorder %s74, 0
    %p236 = por %p234, %p235
    %p237 = scmp.ne.s32.totalorder %s225, %s226
    %p238 = scmp.eq.s32.totalorder %s75, 1
    %p239 = por %p237, %p238
    %p241 = scmp.ne.s32.totalorder %s226, %s240
    %p242 = scmp.eq.s32.totalorder %s75, 0
    %p243 = por %p241, %p242
    %s245 = sadd.s32 %s244, 1
    %p248 = scmp.eq.s32.totalorder %s69, 1
    %p249 = scmp.ne.s32.totalorder %s244, %s246
    %p250 = scmp.eq.s32.totalorder %s69, 0
    %p251 = por %p249, %p250
    %p252 = scmp.ne.s32.totalorder %s244, %s246
    %p253 = scmp.eq.s32.totalorder %s74, 1
    %p254 = por %p252, %p253
    %p255 = scmp.ne.s32.totalorder %s246, %s247
    %p256 = scmp.eq.s32.totalorder %s74, 0
    %p257 = por %p255, %p256
    %p258 = scmp.ne.s32.totalorder %s246, %s247
    %p259 = scmp.eq.s32.totalorder %s75, 1
    %p260 = por %p258, %p259
    %p262 = scmp.ne.s32.totalorder %s247, %s261
    %p263 = scmp.eq.s32.totalorder %s75, 0
    %p264 = por %p262, %p263
    %s266 = sadd.s32 %s265, 1
    %p269 = scmp.eq.s32.totalorder %s69, 1
    %p270 = scmp.ne.s32.totalorder %s265, %s267
    %p271 = scmp.eq.s32.totalorder %s69, 0
    %p272 = por %p270, %p271
    %p273 = scmp.ne.s32.totalorder %s265, %s267
    %p274 = scmp.eq.s32.totalorder %s74, 1
    %p275 = por %p273, %p274
    %p276 = scmp.ne.s32.totalorder %s267, %s268
    %p277 = scmp.eq.s32.totalorder %s74, 0
    %p278 = por %p276, %p277
    %p279 = scmp.ne.s32.totalorder %s267, %s268
    %p280 = scmp.eq.s32.totalorder %s75, 1
    %p281 = por %p279, %p280
    %p283 = scmp.ne.s32.totalorder %s268, %s282
    %p284 = scmp.eq.s32.totalorder %s75, 0
    %p285 = por %p283, %p284
    %s287 = sadd.s32 %s286, 1
    %p290 = scmp.eq.s32.totalorder %s69, 1
    %p291 = scmp.ne.s32.totalorder %s286, %s288
    %p292 = scmp.eq.s32.totalorder %s69, 0
    %p293 = por %p291, %p292
    %p294 = scmp.ne.s32.totalorder %s286, %s288
    %p295 = scmp.eq.s32.totalorder %s74, 1
    %p296 = por %p294, %p295
    %p297 = scmp.ne.s32.totalorder %s288, %s289
    %p298 = scmp.eq.s32.totalorder %s74, 0
    %p299 = por %p297, %p298
    %p300 = scmp.ne.s32.totalorder %s288, %s289
    %p301 = scmp.eq.s32.totalorder %s75, 1
    %p302 = por %p300, %p301
    %p304 = scmp.ne.s32.totalorder %s289, %s303
    %p305 = scmp.eq.s32.totalorder %s75, 0
    %p306 = por %p304, %p305
    %s308 = sadd.s32 %s307, 1
    %p311 = scmp.eq.s32.totalorder %s69, 1
    %p312 = scmp.ne.s32.totalorder %s307, %s309
    %p313 = scmp.eq.s32.totalorder %s69, 0
    %p314 = por %p312, %p313
    %p315 = scmp.ne.s32.totalorder %s307, %s309
    %p316 = scmp.eq.s32.totalorder %s74, 1
    %p317 = por %p315, %p316
    %p318 = scmp.ne.s32.totalorder %s309, %s310
    %p319 = scmp.eq.s32.totalorder %s74, 0
    %p320 = por %p318, %p319
    %p321 = scmp.ne.s32.totalorder %s309, %s310
    %p322 = scmp.eq.s32.totalorder %s75, 1
    %p323 = por %p321, %p322
    %p325 = scmp.ne.s32.totalorder %s310, %s324
    %p326 = scmp.eq.s32.totalorder %s75, 0
    %p327 = por %p325, %p326
    %s329 = sadd.s32 %s328, 1
    %p332 = scmp.eq.s32.totalorder %s69, 1
    %p333 = scmp.ne.s32.totalorder %s328, %s330
    %p334 = scmp.eq.s32.totalorder %s69, 0
    %p335 = por %p333, %p334
    %p336 = scmp.ne.s32.totalorder %s328, %s330
    %p337 = scmp.eq.s32.totalorder %s74, 1
    %p338 = por %p336, %p337
    %p339 = scmp.ne.s32.totalorder %s330, %s331
    %p340 = scmp.eq.s32.totalorder %s74, 0
    %p341 = por %p339, %p340
    %p342 = scmp.ne.s32.totalorder %s330, %s331
    %p343 = scmp.eq.s32.totalorder %s75, 1
    %p344 = por %p342, %p343
    %p346 = scmp.ne.s32.totalorder %s331, %s345
    %p347 = scmp.eq.s32.totalorder %s75, 0
    %p348 = por %p346, %p347
    %s350 = sadd.s32 %s349, 1
    %p353 = scmp.eq.s32.totalorder %s69, 1
    %p354 = scmp.ne.s32.totalorder %s349, %s351
    %p355 = scmp.eq.s32.totalorder %s69, 0
    %p356 = por %p354, %p355
    %p357 = scmp.ne.s32.totalorder %s349, %s351
    %p358 = scmp.eq.s32.totalorder %s74, 1
    %p359 = por %p357, %p358
    %p360 = scmp.ne.s32.totalorder %s351, %s352
    %p361 = scmp.eq.s32.totalorder %s74, 0
    %p362 = por %p360, %p361
    %p363 = scmp.ne.s32.totalorder %s351, %s352
    %p364 = scmp.eq.s32.totalorder %s75, 1
    %p365 = por %p363, %p364
    %p367 = scmp.ne.s32.totalorder %s352, %s366
    %p368 = scmp.eq.s32.totalorder %s75, 0
    %p369 = por %p367, %p368
    %s371 = sadd.s32 %s370, 1
    %p374 = scmp.eq.s32.totalorder %s69, 1
    %p375 = scmp.ne.s32.totalorder %s370, %s372
    %p376 = scmp.eq.s32.totalorder %s69, 0
    %p377 = por %p375, %p376
    %p378 = scmp.ne.s32.totalorder %s370, %s372
    %p379 = scmp.eq.s32.totalorder %s74, 1
    %p380 = por %p378, %p379
    %p381 = scmp.ne.s32.totalorder %s372, %s373
    %p382 = scmp.eq.s32.totalorder %s74, 0
    %p383 = por %p381, %p382
    %p384 = scmp.ne.s32.totalorder %s372, %s373
    %p385 = scmp.eq.s32.totalorder %s75, 1
    %p386 = por %p384, %p385
    %p388 = scmp.ne.s32.totalorder %s373, %s387
    %p389 = scmp.eq.s32.totalorder %s75, 0
    %p390 = por %p388, %p389
    %s392 = sadd.s32 %s391, 1
    %p395 = scmp.eq.s32.totalorder %s69, 1
    %p396 = scmp.ne.s32.totalorder %s391, %s393
    %p397 = scmp.eq.s32.totalorder %s69, 0
    %p398 = por %p396, %p397
    %p399 = scmp.ne.s32.totalorder %s391, %s393
    %p400 = scmp.eq.s32.totalorder %s74, 1
    %p401 = por %p399, %p400
    %p402 = scmp.ne.s32.totalorder %s393, %s394
    %p403 = scmp.eq.s32.totalorder %s74, 0
    %p404 = por %p402, %p403
    %p405 = scmp.ne.s32.totalorder %s393, %s394
    %p406 = scmp.eq.s32.totalorder %s75, 1
    %p407 = por %p405, %p406
    %p409 = scmp.ne.s32.totalorder %s394, %s408
    %p410 = scmp.eq.s32.totalorder %s75, 0
    %p411 = por %p409, %p410
    %s413 = sadd.s32 %s412, 1
    %p416 = scmp.eq.s32.totalorder %s69, 1
    %p417 = scmp.ne.s32.totalorder %s412, %s414
    %p418 = scmp.eq.s32.totalorder %s69, 0
    %p419 = por %p417, %p418
    %p420 = scmp.ne.s32.totalorder %s412, %s414
    %p421 = scmp.eq.s32.totalorder %s74, 1
    %p422 = por %p420, %p421
    %p423 = scmp.ne.s32.totalorder %s414, %s415
    %p424 = scmp.eq.s32.totalorder %s74, 0
    %p425 = por %p423, %p424
    %p426 = scmp.ne.s32.totalorder %s414, %s415
    %p427 = scmp.eq.s32.totalorder %s75, 1
    %p428 = por %p426, %p427
    %p430 = scmp.ne.s32.totalorder %s415, %s429
    %p431 = scmp.eq.s32.totalorder %s75, 0
    %p432 = por %p430, %p431
    %s434 = sadd.s32 %s433, 1
    %p437 = scmp.eq.s32.totalorder %s69, 1
    %p438 = scmp.ne.s32.totalorder %s433, %s435
    %p439 = scmp.eq.s32.totalorder %s69, 0
    %p440 = por %p438, %p439
    %p441 = scmp.ne.s32.totalorder %s433, %s435
    %p442 = scmp.eq.s32.totalorder %s74, 1
    %p443 = por %p441, %p442
    %p444 = scmp.ne.s32.totalorder %s435, %s436
    %p445 = scmp.eq.s32.totalorder %s74, 0
    %p446 = por %p444, %p445
    %p447 = scmp.ne.s32.totalorder %s435, %s436
    %p448 = scmp.eq.s32.totalorder %s75, 1
    %p449 = por %p447, %p448
    %p451 = scmp.ne.s32.totalorder %s436, %s450
    %p452 = scmp.eq.s32.totalorder %s75, 0
    %p453 = por %p451, %p452
    %s455 = sadd.s32 %s454, 1
    %p458 = scmp.eq.s32.totalorder %s69, 1
    %p459 = scmp.ne.s32.totalorder %s454, %s456
    %p460 = scmp.eq.s32.totalorder %s69, 0
    %p461 = por %p459, %p460
    %p462 = scmp.ne.s32.totalorder %s454, %s456
    %p463 = scmp.eq.s32.totalorder %s74, 1
    %p464 = por %p462, %p463
    %p465 = scmp.ne.s32.totalorder %s456, %s457
    %p466 = scmp.eq.s32.totalorder %s74, 0
    %p467 = por %p465, %p466
    %p468 = scmp.ne.s32.totalorder %s456, %s457
    %p469 = scmp.eq.s32.totalorder %s75, 1
    %p470 = por %p468, %p469
    %p472 = scmp.ne.s32.totalorder %s457, %s471
    %p473 = scmp.eq.s32.totalorder %s75, 0
    %p474 = por %p472, %p473
    %s476 = sadd.s32 %s475, 1
    %p479 = scmp.eq.s32.totalorder %s69, 1
    %p480 = scmp.ne.s32.totalorder %s475, %s477
    %p481 = scmp.eq.s32.totalorder %s69, 0
    %p482 = por %p480, %p481
    %p483 = scmp.ne.s32.totalorder %s475, %s477
    %p484 = scmp.eq.s32.totalorder %s74, 1
    %p485 = por %p483, %p484
    %p486 = scmp.ne.s32.totalorder %s477, %s478
    %p487 = scmp.eq.s32.totalorder %s74, 0
    %p488 = por %p486, %p487
    %p489 = scmp.ne.s32.totalorder %s477, %s478
    %p490 = scmp.eq.s32.totalorder %s75, 1
    %p491 = por %p489, %p490
    %p493 = scmp.ne.s32.totalorder %s478, %s492
    %p494 = scmp.eq.s32.totalorder %s75, 0
    %p495 = por %p493, %p494
    %s497 = sadd.s32 %s496, 1
    %p500 = scmp.eq.s32.totalorder %s69, 1
    %p501 = scmp.ne.s32.totalorder %s496, %s498
    %p502 = scmp.eq.s32.totalorder %s69, 0
    %p503 = por %p501, %p502
    %p504 = scmp.ne.s32.totalorder %s496, %s498
    %p505 = scmp.eq.s32.totalorder %s74, 1
    %p506 = por %p504, %p505
    %p507 = scmp.ne.s32.totalorder %s498, %s499
    %p508 = scmp.eq.s32.totalorder %s74, 0
    %p509 = por %p507, %p508
    %p510 = scmp.ne.s32.totalorder %s498, %s499
    %p511 = scmp.eq.s32.totalorder %s75, 1
    %p512 = por %p510, %p511
    %p514 = scmp.ne.s32.totalorder %s499, %s513
    %p515 = scmp.eq.s32.totalorder %s75, 0
    %p516 = por %p514, %p515
    %s518 = sadd.s32 %s517, 1
    %p521 = scmp.eq.s32.totalorder %s69, 1
    %p522 = scmp.ne.s32.totalorder %s517, %s519
    %p523 = scmp.eq.s32.totalorder %s69, 0
    %p524 = por %p522, %p523
    %p525 = scmp.ne.s32.totalorder %s517, %s519
    %p526 = scmp.eq.s32.totalorder %s74, 1
    %p527 = por %p525, %p526
    %p528 = scmp.ne.s32.totalorder %s519, %s520
    %p529 = scmp.eq.s32.totalorder %s74, 0
    %p530 = por %p528, %p529
    %p531 = scmp.ne.s32.totalorder %s519, %s520
    %p532 = scmp.eq.s32.totalorder %s75, 1
    %p533 = por %p531, %p532
    %p535 = scmp.ne.s32.totalorder %s520, %s534
    %p536 = scmp.eq.s32.totalorder %s75, 0
    %p537 = por %p535, %p536
    %s539 = sadd.s32 %s538, 1
    %p542 = scmp.eq.s32.totalorder %s69, 1
    %p543 = scmp.ne.s32.totalorder %s538, %s540
    %p544 = scmp.eq.s32.totalorder %s69, 0
    %p545 = por %p543, %p544
    %p546 = scmp.ne.s32.totalorder %s538, %s540
    %p547 = scmp.eq.s32.totalorder %s74, 1
    %p548 = por %p546, %p547
    %p549 = scmp.ne.s32.totalorder %s540, %s541
    %p550 = scmp.eq.s32.totalorder %s74, 0
    %p551 = por %p549, %p550
    %p552 = scmp.ne.s32.totalorder %s540, %s541
    %p553 = scmp.eq.s32.totalorder %s75, 1
    %p554 = por %p552, %p553
    %p556 = scmp.ne.s32.totalorder %s541, %s555
    %p557 = scmp.eq.s32.totalorder %s75, 0
    %p558 = por %p556, %p557
    %s560 = sadd.s32 %s559, 1
    %p563 = scmp.eq.s32.totalorder %s69, 1
    %p564 = scmp.ne.s32.totalorder %s559, %s561
    %p565 = scmp.eq.s32.totalorder %s69, 0
    %p566 = por %p564, %p565
    %p567 = scmp.ne.s32.totalorder %s559, %s561
    %p568 = scmp.eq.s32.totalorder %s74, 1
    %p569 = por %p567, %p568
    %p570 = scmp.ne.s32.totalorder %s561, %s562
    %p571 = scmp.eq.s32.totalorder %s74, 0
    %p572 = por %p570, %p571
    %p573 = scmp.ne.s32.totalorder %s561, %s562
    %p574 = scmp.eq.s32.totalorder %s75, 1
    %p575 = por %p573, %p574
    %p577 = scmp.ne.s32.totalorder %s562, %s576
    %p578 = scmp.eq.s32.totalorder %s75, 0
    %p579 = por %p577, %p578
    %s581 = sadd.s32 %s580, 1
    %p584 = scmp.eq.s32.totalorder %s69, 1
    %p585 = scmp.ne.s32.totalorder %s580, %s582
    %p586 = scmp.eq.s32.totalorder %s69, 0
    %p587 = por %p585, %p586
    %p588 = scmp.ne.s32.totalorder %s580, %s582
    %p589 = scmp.eq.s32.totalorder %s74, 1
    %p590 = por %p588, %p589
    %p591 = scmp.ne.s32.totalorder %s582, %s583
    %p592 = scmp.eq.s32.totalorder %s74, 0
    %p593 = por %p591, %p592
    %p594 = scmp.ne.s32.totalorder %s582, %s583
    %p595 = scmp.eq.s32.totalorder %s75, 1
    %p596 = por %p594, %p595
    %p598 = scmp.ne.s32.totalorder %s583, %s597
    %p599 = scmp.eq.s32.totalorder %s75, 0
    %p600 = por %p598, %p599
    %s602 = sadd.s32 %s601, 1
    %p605 = scmp.eq.s32.totalorder %s69, 1
    %p606 = scmp.ne.s32.totalorder %s601, %s603
    %p607 = scmp.eq.s32.totalorder %s69, 0
    %p608 = por %p606, %p607
    %p609 = scmp.ne.s32.totalorder %s601, %s603
    %p610 = scmp.eq.s32.totalorder %s74, 1
    %p611 = por %p609, %p610
    %p612 = scmp.ne.s32.totalorder %s603, %s604
    %p613 = scmp.eq.s32.totalorder %s74, 0
    %p614 = por %p612, %p613
    %p615 = scmp.ne.s32.totalorder %s603, %s604
    %p616 = scmp.eq.s32.totalorder %s75, 1
    %p617 = por %p615, %p616
    %p619 = scmp.ne.s32.totalorder %s604, %s618
    %p620 = scmp.eq.s32.totalorder %s75, 0
    %p621 = por %p619, %p620
    %s623 = sadd.s32 %s622, 1
    %p626 = scmp.eq.s32.totalorder %s69, 1
    %p627 = scmp.ne.s32.totalorder %s622, %s624
    %p628 = scmp.eq.s32.totalorder %s69, 0
    %p629 = por %p627, %p628
    %p630 = scmp.ne.s32.totalorder %s622, %s624
    %p631 = scmp.eq.s32.totalorder %s74, 1
    %p632 = por %p630, %p631
    %p633 = scmp.ne.s32.totalorder %s624, %s625
    %p634 = scmp.eq.s32.totalorder %s74, 0
    %p635 = por %p633, %p634
    %p636 = scmp.ne.s32.totalorder %s624, %s625
    %p637 = scmp.eq.s32.totalorder %s75, 1
    %p638 = por %p636, %p637
    %p640 = scmp.ne.s32.totalorder %s625, %s639
    %p641 = scmp.eq.s32.totalorder %s75, 0
    %p642 = por %p640, %p641
    %s644 = sadd.s32 %s643, 1
    %p647 = scmp.eq.s32.totalorder %s69, 1
    %p648 = scmp.ne.s32.totalorder %s643, %s645
    %p649 = scmp.eq.s32.totalorder %s69, 0
    %p650 = por %p648, %p649
    %p651 = scmp.ne.s32.totalorder %s643, %s645
    %p652 = scmp.eq.s32.totalorder %s74, 1
    %p653 = por %p651, %p652
    %p654 = scmp.ne.s32.totalorder %s645, %s646
    %p655 = scmp.eq.s32.totalorder %s74, 0
    %p656 = por %p654, %p655
    %p657 = scmp.ne.s32.totalorder %s645, %s646
    %p658 = scmp.eq.s32.totalorder %s75, 1
    %p659 = por %p657, %p658
    %p661 = scmp.ne.s32.totalorder %s646, %s660
    %p662 = scmp.eq.s32.totalorder %s75, 0
    %p663 = por %p661, %p662
    %s665 = sadd.s32 %s664, 1
    %p668 = scmp.eq.s32.totalorder %s69, 1
    %p669 = scmp.ne.s32.totalorder %s664, %s666
    %p670 = scmp.eq.s32.totalorder %s69, 0
    %p671 = por %p669, %p670
    %p672 = scmp.ne.s32.totalorder %s664, %s666
    %p673 = scmp.eq.s32.totalorder %s74, 1
    %p674 = por %p672, %p673
    %p675 = scmp.ne.s32.totalorder %s666, %s667
    %p676 = scmp.eq.s32.totalorder %s74, 0
    %p677 = por %p675, %p676
    %p678 = scmp.ne.s32.totalorder %s666, %s667
    %p679 = scmp.eq.s32.totalorder %s75, 1
    %p680 = por %p678, %p679
    %p682 = scmp.ne.s32.totalorder %s667, %s681
    %p683 = scmp.eq.s32.totalorder %s75, 0
    %p684 = por %p682, %p683
    %s686 = sadd.s32 %s685, 1
    %p689 = scmp.eq.s32.totalorder %s69, 1
    %p690 = scmp.ne.s32.totalorder %s685, %s687
    %p691 = scmp.eq.s32.totalorder %s69, 0
    %p692 = por %p690, %p691
    %p693 = scmp.ne.s32.totalorder %s685, %s687
    %p694 = scmp.eq.s32.totalorder %s74, 1
    %p695 = por %p693, %p694
    %p696 = scmp.ne.s32.totalorder %s687, %s688
    %p697 = scmp.eq.s32.totalorder %s74, 0
    %p698 = por %p696, %p697
    %p699 = scmp.ne.s32.totalorder %s687, %s688
    %p700 = scmp.eq.s32.totalorder %s75, 1
    %p701 = por %p699, %p700
    %p703 = scmp.ne.s32.totalorder %s688, %s702
    %p704 = scmp.eq.s32.totalorder %s75, 0
    %p705 = por %p703, %p704
    %s707 = sadd.s32 %s706, 1
    %p710 = scmp.eq.s32.totalorder %s69, 1
    %p711 = scmp.ne.s32.totalorder %s706, %s708
    %p712 = scmp.eq.s32.totalorder %s69, 0
    %p713 = por %p711, %p712
    %p714 = scmp.ne.s32.totalorder %s706, %s708
    %p715 = scmp.eq.s32.totalorder %s74, 1
    %p716 = por %p714, %p715
    %p717 = scmp.ne.s32.totalorder %s708, %s709
    %p718 = scmp.eq.s32.totalorder %s74, 0
    %p719 = por %p717, %p718
    %p720 = scmp.ne.s32.totalorder %s708, %s709
    %p721 = scmp.eq.s32.totalorder %s75, 1
    %p722 = por %p720, %p721
    %p724 = scmp.ne.s32.totalorder %s709, %s723
    %p725 = scmp.eq.s32.totalorder %s75, 0
    %p726 = por %p724, %p725
    %s727 = ssub.s32 %s69, %s76
    %p728 = scmp.eq.s32.totalorder %s727, 0
    %s730 = sadd.s32 %s729, 1
    %s731 = scalar_select %p728, %s729, %s730
    %p734 = pneg %p728
    %p735 = scmp.eq.s32.totalorder %s69, 1
    %p736 = por %p734, %p735
    %p737 = scmp.ne.s32.totalorder %s729, %s732
    %p738 = scmp.eq.s32.totalorder %s69, 0
    %p739 = por %p737, %p738
    %p740 = scmp.ne.s32.totalorder %s729, %s732
    %p741 = scmp.eq.s32.totalorder %s74, 1
    %p742 = por %p740, %p741
    %p743 = scmp.ne.s32.totalorder %s732, %s733
    %p744 = scmp.eq.s32.totalorder %s74, 0
    %p745 = por %p743, %p744
    %p746 = scmp.ne.s32.totalorder %s732, %s733
    %p747 = scmp.eq.s32.totalorder %s75, 1
    %p748 = por %p746, %p747
    %p750 = scmp.ne.s32.totalorder %s733, %s749
    %p751 = scmp.eq.s32.totalorder %s75, 0
    %p752 = por %p750, %p751
    %p753 = scmp.le.s32.totalorder 1, %s69
    %p754 = scmp.lt.s32.totalorder %s69, 3
    %p755 = pnand %p753, %p754
    %p756 = pneg %p755
    // Predicated region
    $region9: #{tpu_custom_call.1} parent=5 // pred_check
      _
    $region10: #{tpu_custom_call.1} parent=5 // pred_check_branch
      %758 = sbr.rel (%p755) target = $region12
    $region11: #{tpu_custom_call.1} parent=5 // pred_region
      %s759 = ssub.s32 %s69, 1
      // Predicated region
      $region13: #{tpu_custom_call.1} parent=11 // pred_check
        %p760 = pneg %p194
      $region14: #{tpu_custom_call.1} parent=11 // pred_check_branch
        %762 = sbr.rel (%p760) target = $region16
      $region15: #{tpu_custom_call.1} parent=11 // pred_region
        _
      $region16: #{tpu_custom_call.1} parent=11 // pred_fallthru
        _
      // Predicated region
      $region17: #{tpu_custom_call.1} parent=11 // pred_check
        %p763 = pneg %p215
      $region18: #{tpu_custom_call.1} parent=11 // pred_check_branch
        %765 = sbr.rel (%p763) target = $region20
      $region19: #{tpu_custom_call.1} parent=11 // pred_region
        _
      $region20: #{tpu_custom_call.1} parent=11 // pred_fallthru
        _
      // Predicated region
      $region21: #{tpu_custom_call.1} parent=11 // pred_check
        %p766 = pneg %p236
      $region22: #{tpu_custom_call.1} parent=11 // pred_check_branch
        %768 = sbr.rel (%p766) target = $region24
      $region23: #{tpu_custom_call.1} parent=11 // pred_region
        _
      $region24: #{tpu_custom_call.1} parent=11 // pred_fallthru
        _
      // Predicated region
      $region25: #{tpu_custom_call.1} parent=11 // pred_check
        %p769 = pneg %p257
      $region26: #{tpu_custom_call.1} parent=11 // pred_check_branch
        %771 = sbr.rel (%p769) target = $region28
      $region27: #{tpu_custom_call.1} parent=11 // pred_region
        _
      $region28: #{tpu_custom_call.1} parent=11 // pred_fallthru
        _
      // Predicated region
      $region29: #{tpu_custom_call.1} parent=11 // pred_check
        %p772 = pneg %p278
      $region30: #{tpu_custom_call.1} parent=11 // pred_check_branch
        %774 = sbr.rel (%p772) target = $region32
      $region31: #{tpu_custom_call.1} parent=11 // pred_region
        _
      $region32: #{tpu_custom_call.1} parent=11 // pred_fallthru
        _
      // Predicated region
      $region33: #{tpu_custom_call.1} parent=11 // pred_check
        %p775 = pneg %p299
      $region34: #{tpu_custom_call.1} parent=11 // pred_check_branch
        %777 = sbr.rel (%p775) target = $region36
      $region35: #{tpu_custom_call.1} parent=11 // pred_region
        _
      $region36: #{tpu_custom_call.1} parent=11 // pred_fallthru
        _
      // Predicated region
      $region37: #{tpu_custom_call.1} parent=11 // pred_check
        %p778 = pneg %p320
      $region38: #{tpu_custom_call.1} parent=11 // pred_check_branch
        %780 = sbr.rel (%p778) target = $region40
      $region39: #{tpu_custom_call.1} parent=11 // pred_region
        _
      $region40: #{tpu_custom_call.1} parent=11 // pred_fallthru
        _
      // Predicated region
      $region41: #{tpu_custom_call.1} parent=11 // pred_check
        %p781 = pneg %p341
      $region42: #{tpu_custom_call.1} parent=11 // pred_check_branch
        %783 = sbr.rel (%p781) target = $region44
      $region43: #{tpu_custom_call.1} parent=11 // pred_region
        _
      $region44: #{tpu_custom_call.1} parent=11 // pred_fallthru
        _
      // Predicated region
      $region45: #{tpu_custom_call.1} parent=11 // pred_check
        %p784 = pneg %p362
      $region46: #{tpu_custom_call.1} parent=11 // pred_check_branch
        %786 = sbr.rel (%p784) target = $region48
      $region47: #{tpu_custom_call.1} parent=11 // pred_region
        _
      $region48: #{tpu_custom_call.1} parent=11 // pred_fallthru
        _
      // Predicated region
      $region49: #{tpu_custom_call.1} parent=11 // pred_check
        %p787 = pneg %p383
      $region50: #{tpu_custom_call.1} parent=11 // pred_check_branch
        %789 = sbr.rel (%p787) target = $region52
      $region51: #{tpu_custom_call.1} parent=11 // pred_region
        _
      $region52: #{tpu_custom_call.1} parent=11 // pred_fallthru
        _
      // Predicated region
      $region53: #{tpu_custom_call.1} parent=11 // pred_check
        %p790 = pneg %p404
      $region54: #{tpu_custom_call.1} parent=11 // pred_check_branch
        %792 = sbr.rel (%p790) target = $region56
      $region55: #{tpu_custom_call.1} parent=11 // pred_region
        _
      $region56: #{tpu_custom_call.1} parent=11 // pred_fallthru
        _
      // Predicated region
      $region57: #{tpu_custom_call.1} parent=11 // pred_check
        %p793 = pneg %p425
      $region58: #{tpu_custom_call.1} parent=11 // pred_check_branch
        %795 = sbr.rel (%p793) target = $region60
      $region59: #{tpu_custom_call.1} parent=11 // pred_region
        _
      $region60: #{tpu_custom_call.1} parent=11 // pred_fallthru
        _
      // Predicated region
      $region61: #{tpu_custom_call.1} parent=11 // pred_check
        %p796 = pneg %p446
      $region62: #{tpu_custom_call.1} parent=11 // pred_check_branch
        %798 = sbr.rel (%p796) target = $region64
      $region63: #{tpu_custom_call.1} parent=11 // pred_region
        _
      $region64: #{tpu_custom_call.1} parent=11 // pred_fallthru
        _
      // Predicated region
      $region65: #{tpu_custom_call.1} parent=11 // pred_check
        %p799 = pneg %p467
      $region66: #{tpu_custom_call.1} parent=11 // pred_check_branch
        %801 = sbr.rel (%p799) target = $region68
      $region67: #{tpu_custom_call.1} parent=11 // pred_region
        _
      $region68: #{tpu_custom_call.1} parent=11 // pred_fallthru
        _
      // Predicated region
      $region69: #{tpu_custom_call.1} parent=11 // pred_check
        %p802 = pneg %p488
      $region70: #{tpu_custom_call.1} parent=11 // pred_check_branch
        %804 = sbr.rel (%p802) target = $region72
      $region71: #{tpu_custom_call.1} parent=11 // pred_region
        _
      $region72: #{tpu_custom_call.1} parent=11 // pred_fallthru
        _
      // Predicated region
      $region73: #{tpu_custom_call.1} parent=11 // pred_check
        %p805 = pneg %p509
      $region74: #{tpu_custom_call.1} parent=11 // pred_check_branch
        %807 = sbr.rel (%p805) target = $region76
      $region75: #{tpu_custom_call.1} parent=11 // pred_region
        _
      $region76: #{tpu_custom_call.1} parent=11 // pred_fallthru
        _
      // Predicated region
      $region77: #{tpu_custom_call.1} parent=11 // pred_check
        %p808 = pneg %p530
      $region78: #{tpu_custom_call.1} parent=11 // pred_check_branch
        %810 = sbr.rel (%p808) target = $region80
      $region79: #{tpu_custom_call.1} parent=11 // pred_region
        _
      $region80: #{tpu_custom_call.1} parent=11 // pred_fallthru
        _
      // Predicated region
      $region81: #{tpu_custom_call.1} parent=11 // pred_check
        %p811 = pneg %p551
      $region82: #{tpu_custom_call.1} parent=11 // pred_check_branch
        %813 = sbr.rel (%p811) target = $region84
      $region83: #{tpu_custom_call.1} parent=11 // pred_region
        _
      $region84: #{tpu_custom_call.1} parent=11 // pred_fallthru
        _
      // Predicated region
      $region85: #{tpu_custom_call.1} parent=11 // pred_check
        %p814 = pneg %p572
      $region86: #{tpu_custom_call.1} parent=11 // pred_check_branch
        %816 = sbr.rel (%p814) target = $region88
      $region87: #{tpu_custom_call.1} parent=11 // pred_region
        _
      $region88: #{tpu_custom_call.1} parent=11 // pred_fallthru
        _
      // Predicated region
      $region89: #{tpu_custom_call.1} parent=11 // pred_check
        %p817 = pneg %p593
      $region90: #{tpu_custom_call.1} parent=11 // pred_check_branch
        %819 = sbr.rel (%p817) target = $region92
      $region91: #{tpu_custom_call.1} parent=11 // pred_region
        _
      $region92: #{tpu_custom_call.1} parent=11 // pred_fallthru
        _
      // Predicated region
      $region93: #{tpu_custom_call.1} parent=11 // pred_check
        %p820 = pneg %p614
      $region94: #{tpu_custom_call.1} parent=11 // pred_check_branch
        %822 = sbr.rel (%p820) target = $region96
      $region95: #{tpu_custom_call.1} parent=11 // pred_region
        _
      $region96: #{tpu_custom_call.1} parent=11 // pred_fallthru
        _
      // Predicated region
      $region97: #{tpu_custom_call.1} parent=11 // pred_check
        %p823 = pneg %p635
      $region98: #{tpu_custom_call.1} parent=11 // pred_check_branch
        %825 = sbr.rel (%p823) target = $region100
      $region99: #{tpu_custom_call.1} parent=11 // pred_region
        _
      $region100: #{tpu_custom_call.1} parent=11 // pred_fallthru
        _
      // Predicated region
      $region101: #{tpu_custom_call.1} parent=11 // pred_check
        %p826 = pneg %p656
      $region102: #{tpu_custom_call.1} parent=11 // pred_check_branch
        %828 = sbr.rel (%p826) target = $region104
      $region103: #{tpu_custom_call.1} parent=11 // pred_region
        _
      $region104: #{tpu_custom_call.1} parent=11 // pred_fallthru
        _
      // Predicated region
      $region105: #{tpu_custom_call.1} parent=11 // pred_check
        %p829 = pneg %p677
      $region106: #{tpu_custom_call.1} parent=11 // pred_check_branch
        %831 = sbr.rel (%p829) target = $region108
      $region107: #{tpu_custom_call.1} parent=11 // pred_region
        _
      $region108: #{tpu_custom_call.1} parent=11 // pred_fallthru
        _
      // Predicated region
      $region109: #{tpu_custom_call.1} parent=11 // pred_check
        %p832 = pneg %p698
      $region110: #{tpu_custom_call.1} parent=11 // pred_check_branch
        %834 = sbr.rel (%p832) target = $region112
      $region111: #{tpu_custom_call.1} parent=11 // pred_region
        _
      $region112: #{tpu_custom_call.1} parent=11 // pred_fallthru
        _
      // Predicated region
      $region113: #{tpu_custom_call.1} parent=11 // pred_check
        %p835 = pneg %p719
      $region114: #{tpu_custom_call.1} parent=11 // pred_check_branch
        %837 = sbr.rel (%p835) target = $region116
      $region115: #{tpu_custom_call.1} parent=11 // pred_region
        _
      $region116: #{tpu_custom_call.1} parent=11 // pred_fallthru
        _
    $region12: #{tpu_custom_call.1} parent=5 // pred_fallthru
      _
    %p838 = scmp.lt.s32.totalorder %s69, 2
    // Predicated region
    $region117: #{tpu_custom_call.1} parent=5 // pred_check
      %p839 = pneg %p838
    $region118: #{tpu_custom_call.1} parent=5 // pred_check_branch
      %841 = sbr.rel (%p839) target = $region120
    $region119: #{tpu_custom_call.1} parent=5 // pred_region
      // Predicated region
      $region121: #{tpu_custom_call.1} parent=119 // pred_check
        %p842 = pneg %p89
      $region122: #{tpu_custom_call.1} parent=119 // pred_check_branch
        %844 = sbr.rel (%p842) target = $region124
      $region123: #{tpu_custom_call.1} parent=119 // pred_region
        %p845 = scmp.lt.s32.totalorder %s69, 1
        %s846 = scalar_select %p845, %s69, 1
        %s847 = smul.addr %s846, 2
        %s848 = smul.addr %s847, 8
        %s849 = scalar_lea.vmem %s1, %s848
      $region124: #{tpu_custom_call.1} parent=119 // pred_fallthru
        _
      // Predicated region
      $region125: #{tpu_custom_call.1} parent=119 // pred_check
        %p850 = pneg %p115
      $region126: #{tpu_custom_call.1} parent=119 // pred_check_branch
        %852 = sbr.rel (%p850) target = $region128
      $region127: #{tpu_custom_call.1} parent=119 // pred_region
        %p853 = scmp.lt.s32.totalorder %s69, 1
        %s854 = scalar_select %p853, %s69, 1
        %s855 = smul.addr %s854, 2
        %s856 = smul.addr %s855, 8
        %s857 = scalar_lea.vmem %s3, %s856
      $region128: #{tpu_custom_call.1} parent=119 // pred_fallthru
        _
      // Predicated region
      $region129: #{tpu_custom_call.1} parent=119 // pred_check
        %p858 = pneg %p141
      $region130: #{tpu_custom_call.1} parent=119 // pred_check_branch
        %860 = sbr.rel (%p858) target = $region132
      $region131: #{tpu_custom_call.1} parent=119 // pred_region
        %p861 = scmp.lt.s32.totalorder %s69, 1
        %s862 = scalar_select %p861, %s69, 1
        %s863 = smul.addr %s862, 2
        %s864 = smul.addr %s863, 8
        %s865 = scalar_lea.vmem %s5, %s864
      $region132: #{tpu_custom_call.1} parent=119 // pred_fallthru
        _
      // Predicated region
      $region133: #{tpu_custom_call.1} parent=119 // pred_check
        %p866 = pneg %p167
      $region134: #{tpu_custom_call.1} parent=119 // pred_check_branch
        %868 = sbr.rel (%p866) target = $region136
      $region135: #{tpu_custom_call.1} parent=119 // pred_region
        %p869 = scmp.lt.s32.totalorder %s69, 1
        %s870 = scalar_select %p869, %s69, 1
        %s871 = smul.addr %s870, 8
        %s872 = scalar_lea.vmem %s7, %s871
      $region136: #{tpu_custom_call.1} parent=119 // pred_fallthru
        _
    $region120: #{tpu_custom_call.1} parent=5 // pred_fallthru
      _
    %p873 = scmp.le.s32.totalorder 1, %s69
    %p874 = scmp.lt.s32.totalorder %s69, 3
    %p875 = pnand %p873, %p874
    %p876 = pneg %p875
    // Predicated region
    $region137: #{tpu_custom_call.1} parent=5 // pred_check
      _
    $region138: #{tpu_custom_call.1} parent=5 // pred_check_branch
      %878 = sbr.rel (%p875) target = $region140
    $region139: #{tpu_custom_call.1} parent=5 // pred_region
      %s879 = ssub.s32 %s69, 1
      %p880 = scmp.lt.s32.totalorder %s74, 1
      %s881 = scalar_select %p880, %s74, 1
      %s882 = smul.addr %s881, 2
      %s883 = smul.addr %s882, 8
      %s884 = scalar_lea.vmem %s1, %s883
      %p885 = pneg %p95
      %p886 = pneg %p92
      %p887 = scmp.lt.s32.totalorder %s74, 1
      %s888 = scalar_select %p887, %s74, 1
      %s889 = smul.addr %s888, 2
      %s890 = smul.addr %s889, 8
      %s891 = scalar_lea.vmem %s3, %s890
      %p892 = pneg %p121
      %p893 = pneg %p118
      %p894 = scmp.lt.s32.totalorder %s74, 1
      %s895 = scalar_select %p894, %s74, 1
      %s896 = smul.addr %s895, 2
      %s897 = smul.addr %s896, 8
      %s898 = scalar_lea.vmem %s5, %s897
      %p899 = pneg %p147
      %p900 = pneg %p144
      %p901 = scmp.lt.s32.totalorder %s74, 1
      %s902 = scalar_select %p901, %s74, 1
      %s903 = smul.addr %s902, 8
      %s904 = scalar_lea.vmem %s7, %s903
      %p905 = pneg %p173
      %p906 = pneg %p170
      %p907 = pneg %p194
      %p908 = pneg %p191
      %p909 = pneg %p215
      %p910 = pneg %p212
      %p911 = pneg %p236
      %p912 = pneg %p233
      %p913 = pneg %p257
      %p914 = pneg %p254
      %p915 = pneg %p278
      %p916 = pneg %p275
      %p917 = pneg %p299
      %p918 = pneg %p296
      %p919 = pneg %p320
      %p920 = pneg %p317
      %p921 = pneg %p341
      %p922 = pneg %p338
      %p923 = pneg %p362
      %p924 = pneg %p359
      %p925 = pneg %p383
      %p926 = pneg %p380
      %p927 = pneg %p404
      %p928 = pneg %p401
      %p929 = pneg %p425
      %p930 = pneg %p422
      %p931 = pneg %p446
      %p932 = pneg %p443
      %p933 = pneg %p467
      %p934 = pneg %p464
      %p935 = pneg %p488
      %p936 = pneg %p485
      %p937 = pneg %p509
      %p938 = pneg %p506
      %p939 = pneg %p530
      %p940 = pneg %p527
      %p941 = pneg %p551
      %p942 = pneg %p548
      %p943 = pneg %p572
      %p944 = pneg %p569
      %p945 = pneg %p593
      %p946 = pneg %p590
      %p947 = pneg %p614
      %p948 = pneg %p611
      %p949 = pneg %p635
      %p950 = pneg %p632
      %p951 = pneg %p656
      %p952 = pneg %p653
      %p953 = pneg %p677
      %p954 = pneg %p674
      %p955 = pneg %p698
      %p956 = pneg %p695
      %p957 = pneg %p719
      %p958 = pneg %p716
      %p959 = pneg %p745
      %p960 = pneg %p742
      %p961 = scmp.lt.s32.totalorder %s74, 1
      %s962 = scalar_select %p961, %s74, 1
      %s963 = smul.addr %s962, 8
      %s964 = scalar_lea.vmem %s61, %s963
      %p965 = scmp.lt.s32.totalorder %s74, 1
      %s966 = scalar_select %p965, %s74, 1
      %s967 = smul.addr %s966, 2
      %s968 = smul.addr %s967, 8
      %s969 = scalar_lea.vmem %s1, %s968
      %p970 = scmp.lt.s32.totalorder %s74, 1
      %s971 = scalar_select %p970, %s74, 1
      %s972 = smul.addr %s971, 2
      %s973 = smul.addr %s972, 8
      %s974 = scalar_lea.vmem %s3, %s973
      %p975 = scmp.lt.s32.totalorder %s74, 1
      %s976 = scalar_select %p975, %s74, 1
      %s977 = smul.addr %s976, 2
      %s978 = smul.addr %s977, 8
      %s979 = scalar_lea.vmem %s5, %s978
      %p980 = scmp.lt.s32.totalorder %s74, 1
      %s981 = scalar_select %p980, %s74, 1
      %s982 = smul.addr %s981, 8
      %s983 = scalar_lea.vmem %s7, %s982
      %p984 = scmp.lt.s32.totalorder %s74, 1
      %s985 = scalar_select %p984, %s74, 1
      %s986 = smul.addr %s985, 8
      %s987 = scalar_lea.vmem %s61, %s986
      %v988 = vld [vmem:[%s969] sm:$0xff]
      %v989 = vld [vmem:[%s969 + $0x8] sm:$0xff]
      %v990 = vld [vmem:[%s974] sm:$0xff]
      %v991 = vld [vmem:[%s974 + $0x8] sm:$0xff]
      %v992 = vld [vmem:[%s979] sm:$0xff]
      %v993 = vld [vmem:[%s979 + $0x8] sm:$0xff]
      %v994 = vld [vmem:[%s9] sm:$0x1]
      %996 = vset.pattern.permute.xlu0 0
      %997 = vperm.xlu0 %996, %v988
      %v998 = vpop.permute.xlu0 %997
      %1001 = vset.pattern.permute.xlu0 0
      %1002 = vperm.xlu0 %1001, %v989
      %v1003 = vpop.permute.xlu0 %1002
      %v1006 = vlaneseq
      %v1007 = vshrl.u32 %v1006, 7
      %v1008 = vsub.s32 0, %v1007
      %v1009 = vrot.slane %v994, %v1008
      %v1011 = vmul.f32 %v998, %v1009
      %v1012 = vmul.f32 %v1003, %v1009
      %v1013 = vld [vmem:[%s11] sm:$0x1]
      %v1015 = vlaneseq
      %v1016 = vshrl.u32 %v1015, 7
      %v1017 = vsub.s32 0, %v1016
      %v1018 = vrot.slane %v1013, %v1017
      %v1020 = vadd.f32 %v1011, %v1018
      %v1021 = vadd.f32 %v1012, %v1018
      %v1022 = vmax.f32 %v1020, 0.0
      %v1023 = vmax.f32 %v1021, 0.0
      %v1024 = vld [vmem:[%s13] sm:$0xff]
      %v1025 = vld [vmem:[%s15] sm:$0x1]
      %v1027 = vlaneseq
      %v1028 = vshrl.u32 %v1027, 7
      %v1029 = vsub.s32 0, %v1028
      %v1030 = vrot.slane %v1025, %v1029
      %vm1032 = vcmask 64512
      %v1034 = vsel %vm1032, %v1022, 0
      %v1037 = vsel %vm1032, %v1023, 0
      %1039 = vmatprep.subr.mxu0 0.0
      %1040 = vmatpush1.msra.mxu0 0.0
      %1041 = vmatprep.subr.mxu0 0.0
      %1042 = vmatpush1.msra.mxu0 0.0
      %1043 = vmatprep.subr.mxu0 0.0
      %1044 = vmatpush1.msra.mxu0 0.0
      %1045 = vmatprep.subr.mxu0 0.0
      %1046 = vmatpush1.msra.mxu0 0.0
      %1047 = vmatprep.subr.mxu0 0.0
      %1048 = vmatpush1.msra.mxu0 0.0
      %1049 = vmatprep.subr.mxu0 0.0
      %1050 = vmatpush1.msra.mxu0 0.0
      %1051 = vmatprep.subr.mxu0 0.0
      %1052 = vmatpush1.msra.mxu0 0.0
      %1053 = vmatprep.subr.mxu0 0.0
      %1054 = vmatpush1.msra.mxu0 0.0
      %1055 = vmatprep.subr.mxu0 0.0
      %1056 = vmatpush1.msra.mxu0 0.0
      %1057 = vmatprep.subr.mxu0 0.0
      %1058 = vmatpush1.msra.mxu0 0.0
      %1059 = vmatprep.subr.mxu0 0.0
      %1060 = vmatpush1.msra.mxu0 0.0
      %1061 = vmatprep.subr.mxu0 0.0
      %1062 = vmatpush1.msra.mxu0 0.0
      %1063 = vmatprep.subr.mxu0 0.0
      %1064 = vmatpush1.msra.mxu0 0.0
      %1065 = vmatprep.subr.mxu0 0.0
      %1066 = vmatpush1.msra.mxu0 0.0
      %1067 = vmatprep.subr.mxu0 0.0
      %1068 = vmatpush1.msra.mxu0 0.0
      %1069 = vmatprep.subr.mxu0 0.0
      %1070 = vmatpush1.msra.mxu0 %v1024
      %1071 = vmatprep.subr.mxu0 0.0
      %1072 = vmatpush2.msra.mxu0 0.0
      %1073 = vmatprep.subr.mxu0 0.0
      %1074 = vmatpush2.msra.mxu0 0.0
      %1075 = vmatprep.subr.mxu0 0.0
      %1076 = vmatpush2.msra.mxu0 0.0
      %1077 = vmatprep.subr.mxu0 0.0
      %1078 = vmatpush2.msra.mxu0 0.0
      %1079 = vmatprep.subr.mxu0 0.0
      %1080 = vmatpush2.msra.mxu0 0.0
      %1081 = vmatprep.subr.mxu0 0.0
      %1082 = vmatpush2.msra.mxu0 0.0
      %1083 = vmatprep.subr.mxu0 0.0
      %1084 = vmatpush2.msra.mxu0 0.0
      %1085 = vmatprep.subr.mxu0 0.0
      %1086 = vmatpush2.msra.mxu0 0.0
      %1087 = vmatprep.subr.mxu0 0.0
      %1088 = vmatpush2.msra.mxu0 0.0
      %1089 = vmatprep.subr.mxu0 0.0
      %1090 = vmatpush2.msra.mxu0 0.0
      %1091 = vmatprep.subr.mxu0 0.0
      %1092 = vmatpush2.msra.mxu0 0.0
      %1093 = vmatprep.subr.mxu0 0.0
      %1094 = vmatpush2.msra.mxu0 0.0
      %1095 = vmatprep.subr.mxu0 0.0
      %1096 = vmatpush2.msra.mxu0 0.0
      %1097 = vmatprep.subr.mxu0 0.0
      %1098 = vmatpush2.msra.mxu0 0.0
      %1099 = vmatprep.subr.mxu0 0.0
      %1100 = vmatpush2.msra.mxu0 0.0
      %1101 = vmatprep.subr.mxu0 0.0
      %1102 = vmatpush2.msra.mxu0 0.0
      %1103 = vmatprep.mubr.f32.mxu0 0.0
      %1104 = vmatmul.mubr.f32.gmra.mxu0 %v1034
      %v1105 = vpop.f32.mrf.mxu0
      %v1106 = vadd.f32 %v1030, %v1105
      %v1107 = vpop.f32.mrf.mxu0
      %1108 = vmatprep.mubr.f32.mxu0 0.0
      %1109 = vmatmul.mubr.f32.gmra.mxu0 %v1037
      %v1110 = vpop.f32.mrf.mxu0
      %v1111 = vadd.f32 %v1030, %v1110
      %v1112 = vpop.f32.mrf.mxu0
      %1113 = vdwg.mxu0
      %v1114 = vld [vmem:[%s17] sm:$0x1]
      %v1116 = vlaneseq
      %v1117 = vshrl.u32 %v1116, 7
      %v1118 = vsub.s32 0, %v1117
      %v1119 = vrot.slane %v1114, %v1118
      %v1121 = vmul.f32 %v998, %v1119
      %v1122 = vmul.f32 %v1003, %v1119
      %v1123 = vld [vmem:[%s19] sm:$0x1]
      %v1125 = vlaneseq
      %v1126 = vshrl.u32 %v1125, 7
      %v1127 = vsub.s32 0, %v1126
      %v1128 = vrot.slane %v1123, %v1127
      %v1130 = vadd.f32 %v1121, %v1128
      %v1131 = vadd.f32 %v1122, %v1128
      %v1132 = vmax.f32 %v1130, 0.0
      %v1133 = vmax.f32 %v1131, 0.0
      %v1134 = vld [vmem:[%s21] sm:$0xff]
      %v1135 = vld [vmem:[%s23] sm:$0x1]
      %v1137 = vlaneseq
      %v1138 = vshrl.u32 %v1137, 7
      %v1139 = vsub.s32 0, %v1138
      %v1140 = vrot.slane %v1135, %v1139
      %v1143 = vsel %vm1032, %v1132, 0
      %v1146 = vsel %vm1032, %v1133, 0
      %1148 = vmatprep.subr.mxu0 0.0
      %1149 = vmatpush1.msra.mxu0 0.0
      %1150 = vmatprep.subr.mxu0 0.0
      %1151 = vmatpush1.msra.mxu0 0.0
      %1152 = vmatprep.subr.mxu0 0.0
      %1153 = vmatpush1.msra.mxu0 0.0
      %1154 = vmatprep.subr.mxu0 0.0
      %1155 = vmatpush1.msra.mxu0 0.0
      %1156 = vmatprep.subr.mxu0 0.0
      %1157 = vmatpush1.msra.mxu0 0.0
      %1158 = vmatprep.subr.mxu0 0.0
      %1159 = vmatpush1.msra.mxu0 0.0
      %1160 = vmatprep.subr.mxu0 0.0
      %1161 = vmatpush1.msra.mxu0 0.0
      %1162 = vmatprep.subr.mxu0 0.0
      %1163 = vmatpush1.msra.mxu0 0.0
      %1164 = vmatprep.subr.mxu0 0.0
      %1165 = vmatpush1.msra.mxu0 0.0
      %1166 = vmatprep.subr.mxu0 0.0
      %1167 = vmatpush1.msra.mxu0 0.0
      %1168 = vmatprep.subr.mxu0 0.0
      %1169 = vmatpush1.msra.mxu0 0.0
      %1170 = vmatprep.subr.mxu0 0.0
      %1171 = vmatpush1.msra.mxu0 0.0
      %1172 = vmatprep.subr.mxu0 0.0
      %1173 = vmatpush1.msra.mxu0 0.0
      %1174 = vmatprep.subr.mxu0 0.0
      %1175 = vmatpush1.msra.mxu0 0.0
      %1176 = vmatprep.subr.mxu0 0.0
      %1177 = vmatpush1.msra.mxu0 0.0
      %1178 = vmatprep.subr.mxu0 0.0
      %1179 = vmatpush1.msra.mxu0 %v1134
      %1180 = vmatprep.subr.mxu0 0.0
      %1181 = vmatpush2.msra.mxu0 0.0
      %1182 = vmatprep.subr.mxu0 0.0
      %1183 = vmatpush2.msra.mxu0 0.0
      %1184 = vmatprep.subr.mxu0 0.0
      %1185 = vmatpush2.msra.mxu0 0.0
      %1186 = vmatprep.subr.mxu0 0.0
      %1187 = vmatpush2.msra.mxu0 0.0
      %1188 = vmatprep.subr.mxu0 0.0
      %1189 = vmatpush2.msra.mxu0 0.0
      %1190 = vmatprep.subr.mxu0 0.0
      %1191 = vmatpush2.msra.mxu0 0.0
      %1192 = vmatprep.subr.mxu0 0.0
      %1193 = vmatpush2.msra.mxu0 0.0
      %1194 = vmatprep.subr.mxu0 0.0
      %1195 = vmatpush2.msra.mxu0 0.0
      %1196 = vmatprep.subr.mxu0 0.0
      %1197 = vmatpush2.msra.mxu0 0.0
      %1198 = vmatprep.subr.mxu0 0.0
      %1199 = vmatpush2.msra.mxu0 0.0
      %1200 = vmatprep.subr.mxu0 0.0
      %1201 = vmatpush2.msra.mxu0 0.0
      %1202 = vmatprep.subr.mxu0 0.0
      %1203 = vmatpush2.msra.mxu0 0.0
      %1204 = vmatprep.subr.mxu0 0.0
      %1205 = vmatpush2.msra.mxu0 0.0
      %1206 = vmatprep.subr.mxu0 0.0
      %1207 = vmatpush2.msra.mxu0 0.0
      %1208 = vmatprep.subr.mxu0 0.0
      %1209 = vmatpush2.msra.mxu0 0.0
      %1210 = vmatprep.subr.mxu0 0.0
      %1211 = vmatpush2.msra.mxu0 0.0
      %1212 = vmatprep.mubr.f32.mxu0 0.0
      %1213 = vmatmul.mubr.f32.gmra.mxu0 %v1143
      %v1214 = vpop.f32.mrf.mxu0
      %v1215 = vadd.f32 %v1140, %v1214
      %v1216 = vpop.f32.mrf.mxu0
      %1217 = vmatprep.mubr.f32.mxu0 0.0
      %1218 = vmatmul.mubr.f32.gmra.mxu0 %v1146
      %v1219 = vpop.f32.mrf.mxu0
      %v1220 = vadd.f32 %v1140, %v1219
      %v1221 = vpop.f32.mrf.mxu0
      %1222 = vdwg.mxu0
      %v1223 = vsub.f32 %v992, 1.0
      %v1224 = vsub.f32 %v993, 1.0
      %v1225 = vmul.f32 %v1223, 1e+10
      %v1226 = vmul.f32 %v1224, 1e+10
      %v1227 = vadd.f32 %v990, %v1225
      %v1228 = vadd.f32 %v991, %v1226
      %vm1229 = vcmask 31744
      %v1230 = vsel %vm1229, %v1227, -inf
      %v1231 = vsel %vm1229, %v1228, -inf
      %v1232 = vmax.f32 %v1230, %v1231
      %v1233 = vrot.slane %v1232, 4
      %v1234 = vmax.f32 %v1232, %v1233
      %v1235 = vrot.slane %v1234, 2
      %v1236 = vmax.f32 %v1234, %v1235
      %v1237 = vrot.slane %v1236, 1
      %v1238 = vmax.f32 %v1236, %v1237
      %vm1239 = vcmp.gt.f32.partialorder %v1238, -1e+09
      %v1240 = vsel %vm1239, %v1238, 0.0
      %vm1241 = vcmp.gt.f32.partialorder %v992, 0.0
      %vm1242 = vcmp.gt.f32.partialorder %v993, 0.0
      %v1243 = vsub.f32 %v990, %v1240
      %v1244 = vsub.f32 %v991, %v1240
      %v1245 = vsel %vm1241, %v1243, -10000.0
      %v1246 = vsel %vm1242, %v1244, -10000.0
      %v1247 = vmul.f32 %v1245, 1.442695
      %v1248 = vpow.pop %v1247
      %v1249 = vmul.f32 %v1246, 1.442695
      %v1250 = vpow.pop %v1249
      %vm1251 = vcmask 261120
      %v1252 = vsel %vm1251, %v1215, -inf
      %v1253 = vsel %vm1251, %v1220, -inf
      %v1254 = vmax.f32 %v1252, %v1253
      %v1255 = vrot.slane %v1254, 4
      %v1256 = vmax.f32 %v1254, %v1255
      %v1257 = vrot.slane %v1256, 2
      %v1258 = vmax.f32 %v1256, %v1257
      %v1259 = vrot.slane %v1258, 1
      %v1260 = vmax.f32 %v1258, %v1259
      %v1261 = vsub.f32 %v1215, %v1260
      %v1262 = vsub.f32 %v1220, %v1260
      %v1263 = vmul.f32 %v1261, 1.442695
      %v1264 = vpow.pop %v1263
      %v1265 = vmul.f32 %v1262, 1.442695
      %v1266 = vpow.pop %v1265
      %v1267 = vmul.f32 %v990, %v1248
      %v1268 = vmul.f32 %v991, %v1250
      %v1269 = vmul.f32 %v1106, %v1264
      %v1270 = vmul.f32 %v1111, %v1266
      %1271 = vxpose.xlu0.b32.start [1/16] %v1267, 128
      %1272 = vxpose.xlu0.b32.cont [2/16] %v1268, 128
      %1273 = vxpose.xlu0.b32.cont [3/16] 0.0, 128
      %1274 = vxpose.xlu0.b32.cont [4/16] 0.0, 128
      %1275 = vxpose.xlu0.b32.cont [5/16] 0.0, 128
      %1276 = vxpose.xlu0.b32.cont [6/16] 0.0, 128
      %1277 = vxpose.xlu0.b32.cont [7/16] 0.0, 128
      %1278 = vxpose.xlu0.b32.cont [8/16] 0.0, 128
      %1279 = vxpose.xlu0.b32.cont [9/16] 0.0, 128
      %1280 = vxpose.xlu0.b32.cont [10/16] 0.0, 128
      %1281 = vxpose.xlu0.b32.cont [11/16] 0.0, 128
      %1282 = vxpose.xlu0.b32.cont [12/16] 0.0, 128
      %1283 = vxpose.xlu0.b32.cont [13/16] 0.0, 128
      %1284 = vxpose.xlu0.b32.cont [14/16] 0.0, 128
      %1285 = vxpose.xlu0.b32.cont [15/16] 0.0, 128
      %1286 = vxpose.xlu0.b32.end [16/16] 0.0, 128
      %v1287 = vpop.trf.xlu0
      %v1288 = vpop.trf.xlu0
      %v1289 = vpop.trf.xlu0
      %v1290 = vpop.trf.xlu0
      %v1291 = vpop.trf.xlu0
      %v1292 = vpop.trf.xlu0
      %v1293 = vpop.trf.xlu0
      %v1294 = vpop.trf.xlu0
      %v1295 = vpop.trf.xlu0
      %v1296 = vpop.trf.xlu0
      %v1297 = vpop.trf.xlu0
      %v1298 = vpop.trf.xlu0
      %v1299 = vpop.trf.xlu0
      %v1300 = vpop.trf.xlu0
      %v1301 = vpop.trf.xlu0
      %v1302 = vpop.trf.xlu0
      %vm1303 = vcmask 130048
      %v1305 = vsel %vm1303, %v1287, 0
      %1307 = vmatprep.subr.mxu0 0.0
      %1308 = vmatpush1.msra.mxu0 0.0
      %1309 = vmatprep.subr.mxu0 0.0
      %1310 = vmatpush1.msra.mxu0 0.0
      %1311 = vmatprep.subr.mxu0 0.0
      %1312 = vmatpush1.msra.mxu0 0.0
      %1313 = vmatprep.subr.mxu0 0.0
      %1314 = vmatpush1.msra.mxu0 0.0
      %1315 = vmatprep.subr.mxu0 0.0
      %1316 = vmatpush1.msra.mxu0 0.0
      %1317 = vmatprep.subr.mxu0 0.0
      %1318 = vmatpush1.msra.mxu0 0.0
      %1319 = vmatprep.subr.mxu0 0.0
      %1320 = vmatpush1.msra.mxu0 0.0
      %1321 = vmatprep.subr.mxu0 0.0
      %1322 = vmatpush1.msra.mxu0 0.0
      %1323 = vmatprep.subr.mxu0 0.0
      %1324 = vmatpush1.msra.mxu0 0.0
      %1325 = vmatprep.subr.mxu0 0.0
      %1326 = vmatpush1.msra.mxu0 0.0
      %1327 = vmatprep.subr.mxu0 0.0
      %1328 = vmatpush1.msra.mxu0 0.0
      %1329 = vmatprep.subr.mxu0 0.0
      %1330 = vmatpush1.msra.mxu0 0.0
      %1331 = vmatprep.subr.mxu0 0.0
      %1332 = vmatpush1.msra.mxu0 0.0
      %1333 = vmatprep.subr.mxu0 0.0
      %1334 = vmatpush1.msra.mxu0 0.0
      %1335 = vmatprep.subr.mxu0 0.0
      %1336 = vmatpush1.msra.mxu0 %v1270
      %1337 = vmatprep.subr.mxu0 0.0
      %1338 = vmatpush1.msra.mxu0 %v1269
      %1339 = vmatprep.subr.mxu0 0.0
      %1340 = vmatpush2.msra.mxu0 0.0
      %1341 = vmatprep.subr.mxu0 0.0
      %1342 = vmatpush2.msra.mxu0 0.0
      %1343 = vmatprep.subr.mxu0 0.0
      %1344 = vmatpush2.msra.mxu0 0.0
      %1345 = vmatprep.subr.mxu0 0.0
      %1346 = vmatpush2.msra.mxu0 0.0
      %1347 = vmatprep.subr.mxu0 0.0
      %1348 = vmatpush2.msra.mxu0 0.0
      %1349 = vmatprep.subr.mxu0 0.0
      %1350 = vmatpush2.msra.mxu0 0.0
      %1351 = vmatprep.subr.mxu0 0.0
      %1352 = vmatpush2.msra.mxu0 0.0
      %1353 = vmatprep.subr.mxu0 0.0
      %1354 = vmatpush2.msra.mxu0 0.0
      %1355 = vmatprep.subr.mxu0 0.0
      %1356 = vmatpush2.msra.mxu0 0.0
      %1357 = vmatprep.subr.mxu0 0.0
      %1358 = vmatpush2.msra.mxu0 0.0
      %1359 = vmatprep.subr.mxu0 0.0
      %1360 = vmatpush2.msra.mxu0 0.0
      %1361 = vmatprep.subr.mxu0 0.0
      %1362 = vmatpush2.msra.mxu0 0.0
      %1363 = vmatprep.subr.mxu0 0.0
      %1364 = vmatpush2.msra.mxu0 0.0
      %1365 = vmatprep.subr.mxu0 0.0
      %1366 = vmatpush2.msra.mxu0 0.0
      %1367 = vmatprep.subr.mxu0 0.0
      %1368 = vmatpush2.msra.mxu0 0.0
      %1369 = vmatprep.subr.mxu0 0.0
      %1370 = vmatpush2.msra.mxu0 0.0
      %1371 = vmatprep.mubr.f32.mxu0 0.0
      %1372 = vmatmul.mubr.f32.gmra.mxu0 %v1305
      %v1373 = vpop.f32.mrf.mxu0
      %v1374 = vadd.f32 0.0, %v1373
      %v1375 = vpop.f32.mrf.mxu0
      %1376 = vdwg.mxu0
      %1377 = vxpose.xlu0.b32.start [1/16] %v1248, 128
      %1378 = vxpose.xlu0.b32.cont [2/16] %v1250, 128
      %1379 = vxpose.xlu0.b32.cont [3/16] 0.0, 128
      %1380 = vxpose.xlu0.b32.cont [4/16] 0.0, 128
      %1381 = vxpose.xlu0.b32.cont [5/16] 0.0, 128
      %1382 = vxpose.xlu0.b32.cont [6/16] 0.0, 128
      %1383 = vxpose.xlu0.b32.cont [7/16] 0.0, 128
      %1384 = vxpose.xlu0.b32.cont [8/16] 0.0, 128
      %1385 = vxpose.xlu0.b32.cont [9/16] 0.0, 128
      %1386 = vxpose.xlu0.b32.cont [10/16] 0.0, 128
      %1387 = vxpose.xlu0.b32.cont [11/16] 0.0, 128
      %1388 = vxpose.xlu0.b32.cont [12/16] 0.0, 128
      %1389 = vxpose.xlu0.b32.cont [13/16] 0.0, 128
      %1390 = vxpose.xlu0.b32.cont [14/16] 0.0, 128
      %1391 = vxpose.xlu0.b32.cont [15/16] 0.0, 128
      %1392 = vxpose.xlu0.b32.end [16/16] 0.0, 128
      %v1393 = vpop.trf.xlu0
      %v1394 = vpop.trf.xlu0
      %v1395 = vpop.trf.xlu0
      %v1396 = vpop.trf.xlu0
      %v1397 = vpop.trf.xlu0
      %v1398 = vpop.trf.xlu0
      %v1399 = vpop.trf.xlu0
      %v1400 = vpop.trf.xlu0
      %v1401 = vpop.trf.xlu0
      %v1402 = vpop.trf.xlu0
      %v1403 = vpop.trf.xlu0
      %v1404 = vpop.trf.xlu0
      %v1405 = vpop.trf.xlu0
      %v1406 = vpop.trf.xlu0
      %v1407 = vpop.trf.xlu0
      %v1408 = vpop.trf.xlu0
      %v1410 = vsel %vm1303, %v1393, 0
      %1412 = vmatprep.subr.mxu0 0.0
      %1413 = vmatpush1.msra.mxu0 0.0
      %1414 = vmatprep.subr.mxu0 0.0
      %1415 = vmatpush1.msra.mxu0 0.0
      %1416 = vmatprep.subr.mxu0 0.0
      %1417 = vmatpush1.msra.mxu0 0.0
      %1418 = vmatprep.subr.mxu0 0.0
      %1419 = vmatpush1.msra.mxu0 0.0
      %1420 = vmatprep.subr.mxu0 0.0
      %1421 = vmatpush1.msra.mxu0 0.0
      %1422 = vmatprep.subr.mxu0 0.0
      %1423 = vmatpush1.msra.mxu0 0.0
      %1424 = vmatprep.subr.mxu0 0.0
      %1425 = vmatpush1.msra.mxu0 0.0
      %1426 = vmatprep.subr.mxu0 0.0
      %1427 = vmatpush1.msra.mxu0 0.0
      %1428 = vmatprep.subr.mxu0 0.0
      %1429 = vmatpush1.msra.mxu0 0.0
      %1430 = vmatprep.subr.mxu0 0.0
      %1431 = vmatpush1.msra.mxu0 0.0
      %1432 = vmatprep.subr.mxu0 0.0
      %1433 = vmatpush1.msra.mxu0 0.0
      %1434 = vmatprep.subr.mxu0 0.0
      %1435 = vmatpush1.msra.mxu0 0.0
      %1436 = vmatprep.subr.mxu0 0.0
      %1437 = vmatpush1.msra.mxu0 0.0
      %1438 = vmatprep.subr.mxu0 0.0
      %1439 = vmatpush1.msra.mxu0 0.0
      %1440 = vmatprep.subr.mxu0 0.0
      %1441 = vmatpush1.msra.mxu0 %v1266
      %1442 = vmatprep.subr.mxu0 0.0
      %1443 = vmatpush1.msra.mxu0 %v1264
      %1444 = vmatprep.subr.mxu0 0.0
      %1445 = vmatpush2.msra.mxu0 0.0
      %1446 = vmatprep.subr.mxu0 0.0
      %1447 = vmatpush2.msra.mxu0 0.0
      %1448 = vmatprep.subr.mxu0 0.0
      %1449 = vmatpush2.msra.mxu0 0.0
      %1450 = vmatprep.subr.mxu0 0.0
      %1451 = vmatpush2.msra.mxu0 0.0
      %1452 = vmatprep.subr.mxu0 0.0
      %1453 = vmatpush2.msra.mxu0 0.0
      %1454 = vmatprep.subr.mxu0 0.0
      %1455 = vmatpush2.msra.mxu0 0.0
      %1456 = vmatprep.subr.mxu0 0.0
      %1457 = vmatpush2.msra.mxu0 0.0
      %1458 = vmatprep.subr.mxu0 0.0
      %1459 = vmatpush2.msra.mxu0 0.0
      %1460 = vmatprep.subr.mxu0 0.0
      %1461 = vmatpush2.msra.mxu0 0.0
      %1462 = vmatprep.subr.mxu0 0.0
      %1463 = vmatpush2.msra.mxu0 0.0
      %1464 = vmatprep.subr.mxu0 0.0
      %1465 = vmatpush2.msra.mxu0 0.0
      %1466 = vmatprep.subr.mxu0 0.0
      %1467 = vmatpush2.msra.mxu0 0.0
      %1468 = vmatprep.subr.mxu0 0.0
      %1469 = vmatpush2.msra.mxu0 0.0
      %1470 = vmatprep.subr.mxu0 0.0
      %1471 = vmatpush2.msra.mxu0 0.0
      %1472 = vmatprep.subr.mxu0 0.0
      %1473 = vmatpush2.msra.mxu0 0.0
      %1474 = vmatprep.subr.mxu0 0.0
      %1475 = vmatpush2.msra.mxu0 0.0
      %1476 = vmatprep.mubr.f32.mxu0 0.0
      %1477 = vmatmul.mubr.f32.gmra.mxu0 %v1410
      %v1478 = vpop.f32.mrf.mxu0
      %v1479 = vadd.f32 0.0, %v1478
      %v1480 = vpop.f32.mrf.mxu0
      %1481 = vdwg.mxu0
      %vm1482 = vcmp.gt.f32.partialorder %v1479, 0.0
      %v1483 = vsel %vm1482, %v1479, 1.0
      %v1484 = vrcp.pop %v1483
      %v1485 = vmul.f32 %v1374, %v1484
      %v1486 = vld [vmem:[%s25] sm:$0xf]
      %v1487 = vadd.f32 %v1485, %v1486
      %v1488 = vmul.f32 %v1487, %v1487
      %vm1489 = vcmask 257024
      %v1490 = vsel %vm1489, %v1488, 0.0
      %1491 = vadd.xlane.f32.xlu0 %v1490
      %v1492 = vpop.xlane.xlu0 %1491
      %v1493 = vrot.slane %v1492, 4
      %v1494 = vadd.f32 %v1492, %v1493
      %v1495 = vrot.slane %v1494, 2
      %v1496 = vadd.f32 %v1494, %v1495
      %v1497 = vrot.slane %v1496, 1
      %v1498 = vadd.f32 %v1496, %v1497
      %s1499 = vtos %v1498
      %v1500 = vstv %s1499
      %v1501 = vrcp.pop 128.0
      %v1502 = vmul.f32 %v1500, %v1501
      %v1503 = vadd.f32 %v1502, 1.1920929e-07
      %v1504 = vrsqrt.pop %v1503
      %v1505 = vmul.f32 %v1487, %v1504
      %v1506 = vld [vmem:[%s27] sm:$0xf]
      %v1507 = vmul.f32 %v1505, %v1506
      %v1508 = vld [vmem:[%s29] sm:$0xf]
      %v1509 = vld [vmem:[%s31] sm:$0xf]
      %1511 = vset.pattern.permute.xlu0 0
      %1512 = vperm.xlu0 %1511, %v1509
      %v1513 = vpop.permute.xlu0 %1512
      %v1516 = vsel %vm1229, %v1508, 0
      %vm1518 = vcmask 1043456
      %v1520 = vsel %vm1518, %v1507, 0
      %1522 = vmatprep.subr.mxu0 0.0
      %1523 = vmatpush1.msra.mxu0 0.0
      %1524 = vmatprep.subr.mxu0 0.0
      %1525 = vmatpush1.msra.mxu0 0.0
      %1526 = vmatprep.subr.mxu0 0.0
      %1527 = vmatpush1.msra.mxu0 0.0
      %1528 = vmatprep.subr.mxu0 0.0
      %1529 = vmatpush1.msra.mxu0 0.0
      %1530 = vmatprep.subr.mxu0 0.0
      %1531 = vmatpush1.msra.mxu0 0.0
      %1532 = vmatprep.subr.mxu0 0.0
      %1533 = vmatpush1.msra.mxu0 0.0
      %1534 = vmatprep.subr.mxu0 0.0
      %1535 = vmatpush1.msra.mxu0 0.0
      %1536 = vmatprep.subr.mxu0 0.0
      %1537 = vmatpush1.msra.mxu0 0.0
      %1538 = vmatprep.subr.mxu0 0.0
      %1539 = vmatpush1.msra.mxu0 0.0
      %1540 = vmatprep.subr.mxu0 0.0
      %1541 = vmatpush1.msra.mxu0 0.0
      %1542 = vmatprep.subr.mxu0 0.0
      %1543 = vmatpush1.msra.mxu0 0.0
      %1544 = vmatprep.subr.mxu0 0.0
      %1545 = vmatpush1.msra.mxu0 0.0
      %1546 = vmatprep.subr.mxu0 0.0
      %1547 = vmatpush1.msra.mxu0 0.0
      %1548 = vmatprep.subr.mxu0 0.0
      %1549 = vmatpush1.msra.mxu0 0.0
      %1550 = vmatprep.subr.mxu0 0.0
      %1551 = vmatpush1.msra.mxu0 0.0
      %1552 = vmatprep.subr.mxu0 0.0
      %1553 = vmatpush1.msra.mxu0 %v1520
      %1554 = vmatprep.subr.mxu0 0.0
      %1555 = vmatpush2.msra.mxu0 0.0
      %1556 = vmatprep.subr.mxu0 0.0
      %1557 = vmatpush2.msra.mxu0 0.0
      %1558 = vmatprep.subr.mxu0 0.0
      %1559 = vmatpush2.msra.mxu0 0.0
      %1560 = vmatprep.subr.mxu0 0.0
      %1561 = vmatpush2.msra.mxu0 0.0
      %1562 = vmatprep.subr.mxu0 0.0
      %1563 = vmatpush2.msra.mxu0 0.0
      %1564 = vmatprep.subr.mxu0 0.0
      %1565 = vmatpush2.msra.mxu0 0.0
      %1566 = vmatprep.subr.mxu0 0.0
      %1567 = vmatpush2.msra.mxu0 0.0
      %1568 = vmatprep.subr.mxu0 0.0
      %1569 = vmatpush2.msra.mxu0 0.0
      %1570 = vmatprep.subr.mxu0 0.0
      %1571 = vmatpush2.msra.mxu0 0.0
      %1572 = vmatprep.subr.mxu0 0.0
      %1573 = vmatpush2.msra.mxu0 0.0
      %1574 = vmatprep.subr.mxu0 0.0
      %1575 = vmatpush2.msra.mxu0 0.0
      %1576 = vmatprep.subr.mxu0 0.0
      %1577 = vmatpush2.msra.mxu0 0.0
      %1578 = vmatprep.subr.mxu0 0.0
      %1579 = vmatpush2.msra.mxu0 0.0
      %1580 = vmatprep.subr.mxu0 0.0
      %1581 = vmatpush2.msra.mxu0 0.0
      %1582 = vmatprep.subr.mxu0 0.0
      %1583 = vmatpush2.msra.mxu0 0.0
      %1584 = vmatprep.subr.mxu0 0.0
      %1585 = vmatpush2.msra.mxu0 0.0
      %1586 = vmatprep.mubr.f32.mxu0 0.0
      %1587 = vmatmul.mubr.f32.gmra.mxu0 %v1516
      %v1588 = vpop.f32.mrf.mxu0
      %v1589 = vadd.f32 %v1513, %v1588
      %v1590 = vpop.f32.mrf.mxu0
      %1591 = vdwg.mxu0
      %v1592 = vmax.f32 %v1589, 0.0
      %v1593 = vadd.f32 %v1487, %v1592
      %v1594 = vmul.f32 %v1593, %v1593
      %v1595 = vsel %vm1489, %v1594, 0.0
      %1596 = vadd.xlane.f32.xlu0 %v1595
      %v1597 = vpop.xlane.xlu0 %1596
      %v1598 = vrot.slane %v1597, 4
      %v1599 = vadd.f32 %v1597, %v1598
      %v1600 = vrot.slane %v1599, 2
      %v1601 = vadd.f32 %v1599, %v1600
      %v1602 = vrot.slane %v1601, 1
      %v1603 = vadd.f32 %v1601, %v1602
      %s1604 = vtos %v1603
      %v1605 = vstv %s1604
      %v1606 = vmul.f32 %v1605, %v1501
      %v1607 = vadd.f32 %v1606, 1.1920929e-07
      %v1608 = vrsqrt.pop %v1607
      %v1609 = vmul.f32 %v1593, %v1608
      %v1610 = vld [vmem:[%s33] sm:$0xf]
      %v1611 = vmul.f32 %v1609, %v1610
      %v1612 = vld [vmem:[%s35] sm:$0xff]
      %v1613 = vld [vmem:[%s35 + $0x8] sm:$0xff]
      %v1614 = vld [vmem:[%s35 + $0x10] sm:$0xff]
      %v1615 = vld [vmem:[%s35 + $0x18] sm:$0xff]
      %v1616 = vld [vmem:[%s37] sm:$0x1]
      %v1618 = vlaneseq
      %v1619 = vshrl.u32 %v1618, 7
      %v1620 = vsub.s32 0, %v1619
      %v1621 = vrot.slane %v1616, %v1620
      %v1624 = vsel %vm1251, %v1611, 0
      %1626 = vmatprep.subr.mxu0 0.0
      %1627 = vmatpush1.msra.mxu0 0.0
      %1628 = vmatprep.subr.mxu0 0.0
      %1629 = vmatpush1.msra.mxu0 0.0
      %1630 = vmatprep.subr.mxu0 0.0
      %1631 = vmatpush1.msra.mxu0 0.0
      %1632 = vmatprep.subr.mxu0 0.0
      %1633 = vmatpush1.msra.mxu0 0.0
      %1634 = vmatprep.subr.mxu0 0.0
      %1635 = vmatpush1.msra.mxu0 0.0
      %1636 = vmatprep.subr.mxu0 0.0
      %1637 = vmatpush1.msra.mxu0 0.0
      %1638 = vmatprep.subr.mxu0 0.0
      %1639 = vmatpush1.msra.mxu0 0.0
      %1640 = vmatprep.subr.mxu0 0.0
      %1641 = vmatpush1.msra.mxu0 0.0
      %1642 = vmatprep.subr.mxu0 0.0
      %1643 = vmatpush1.msra.mxu0 0.0
      %1644 = vmatprep.subr.mxu0 0.0
      %1645 = vmatpush1.msra.mxu0 0.0
      %1646 = vmatprep.subr.mxu0 0.0
      %1647 = vmatpush1.msra.mxu0 0.0
      %1648 = vmatprep.subr.mxu0 0.0
      %1649 = vmatpush1.msra.mxu0 0.0
      %1650 = vmatprep.subr.mxu0 0.0
      %1651 = vmatpush1.msra.mxu0 %v1615
      %1652 = vmatprep.subr.mxu0 0.0
      %1653 = vmatpush1.msra.mxu0 %v1614
      %1654 = vmatprep.subr.mxu0 0.0
      %1655 = vmatpush1.msra.mxu0 %v1613
      %1656 = vmatprep.subr.mxu0 0.0
      %1657 = vmatpush1.msra.mxu0 %v1612
      %1658 = vmatprep.subr.mxu0 0.0
      %1659 = vmatpush2.msra.mxu0 0.0
      %1660 = vmatprep.subr.mxu0 0.0
      %1661 = vmatpush2.msra.mxu0 0.0
      %1662 = vmatprep.subr.mxu0 0.0
      %1663 = vmatpush2.msra.mxu0 0.0
      %1664 = vmatprep.subr.mxu0 0.0
      %1665 = vmatpush2.msra.mxu0 0.0
      %1666 = vmatprep.subr.mxu0 0.0
      %1667 = vmatpush2.msra.mxu0 0.0
      %1668 = vmatprep.subr.mxu0 0.0
      %1669 = vmatpush2.msra.mxu0 0.0
      %1670 = vmatprep.subr.mxu0 0.0
      %1671 = vmatpush2.msra.mxu0 0.0
      %1672 = vmatprep.subr.mxu0 0.0
      %1673 = vmatpush2.msra.mxu0 0.0
      %1674 = vmatprep.subr.mxu0 0.0
      %1675 = vmatpush2.msra.mxu0 0.0
      %1676 = vmatprep.subr.mxu0 0.0
      %1677 = vmatpush2.msra.mxu0 0.0
      %1678 = vmatprep.subr.mxu0 0.0
      %1679 = vmatpush2.msra.mxu0 0.0
      %1680 = vmatprep.subr.mxu0 0.0
      %1681 = vmatpush2.msra.mxu0 0.0
      %1682 = vmatprep.subr.mxu0 0.0
      %1683 = vmatpush2.msra.mxu0 0.0
      %1684 = vmatprep.subr.mxu0 0.0
      %1685 = vmatpush2.msra.mxu0 0.0
      %1686 = vmatprep.subr.mxu0 0.0
      %1687 = vmatpush2.msra.mxu0 0.0
      %1688 = vmatprep.subr.mxu0 0.0
      %1689 = vmatpush2.msra.mxu0 0.0
      %1690 = vmatprep.mubr.f32.mxu0 0.0
      %1691 = vmatmul.mubr.f32.gmra.mxu0 %v1624
      %v1692 = vpop.f32.mrf.mxu0
      %v1693 = vadd.f32 %v1621, %v1692
      %v1694 = vpop.f32.mrf.mxu0
      %1695 = vdwg.mxu0
      %v1696 = vmax.f32 %v1693, 0.0
      %v1697 = vadd.f32 %v1593, %v1696
      %v1698 = vadd.f32 %v1487, %v1697
      %v1699 = vmul.f32 %v1698, %v1698
      %v1700 = vsel %vm1489, %v1699, 0.0
      %1701 = vadd.xlane.f32.xlu0 %v1700
      %v1702 = vpop.xlane.xlu0 %1701
      %v1703 = vrot.slane %v1702, 4
      %v1704 = vadd.f32 %v1702, %v1703
      %v1705 = vrot.slane %v1704, 2
      %v1706 = vadd.f32 %v1704, %v1705
      %v1707 = vrot.slane %v1706, 1
      %v1708 = vadd.f32 %v1706, %v1707
      %s1709 = vtos %v1708
      %v1710 = vstv %s1709
      %v1711 = vmul.f32 %v1710, %v1501
      %v1712 = vadd.f32 %v1711, 1.1920929e-07
      %v1713 = vrsqrt.pop %v1712
      %v1714 = vmul.f32 %v1698, %v1713
      %v1715 = vld [vmem:[%s39] sm:$0xf]
      %v1716 = vmul.f32 %v1714, %v1715
      %v1717 = vld [vmem:[%s41] sm:$0xf]
      %v1718 = vld [vmem:[%s43] sm:$0xf]
      %1720 = vset.pattern.permute.xlu0 0
      %1721 = vperm.xlu0 %1720, %v1718
      %v1722 = vpop.permute.xlu0 %1721
      %v1725 = vsel %vm1229, %v1717, 0
      %v1728 = vsel %vm1518, %v1716, 0
      %1730 = vmatprep.subr.mxu0 0.0
      %1731 = vmatpush1.msra.mxu0 0.0
      %1732 = vmatprep.subr.mxu0 0.0
      %1733 = vmatpush1.msra.mxu0 0.0
      %1734 = vmatprep.subr.mxu0 0.0
      %1735 = vmatpush1.msra.mxu0 0.0
      %1736 = vmatprep.subr.mxu0 0.0
      %1737 = vmatpush1.msra.mxu0 0.0
      %1738 = vmatprep.subr.mxu0 0.0
      %1739 = vmatpush1.msra.mxu0 0.0
      %1740 = vmatprep.subr.mxu0 0.0
      %1741 = vmatpush1.msra.mxu0 0.0
      %1742 = vmatprep.subr.mxu0 0.0
      %1743 = vmatpush1.msra.mxu0 0.0
      %1744 = vmatprep.subr.mxu0 0.0
      %1745 = vmatpush1.msra.mxu0 0.0
      %1746 = vmatprep.subr.mxu0 0.0
      %1747 = vmatpush1.msra.mxu0 0.0
      %1748 = vmatprep.subr.mxu0 0.0
      %1749 = vmatpush1.msra.mxu0 0.0
      %1750 = vmatprep.subr.mxu0 0.0
      %1751 = vmatpush1.msra.mxu0 0.0
      %1752 = vmatprep.subr.mxu0 0.0
      %1753 = vmatpush1.msra.mxu0 0.0
      %1754 = vmatprep.subr.mxu0 0.0
      %1755 = vmatpush1.msra.mxu0 0.0
      %1756 = vmatprep.subr.mxu0 0.0
      %1757 = vmatpush1.msra.mxu0 0.0
      %1758 = vmatprep.subr.mxu0 0.0
      %1759 = vmatpush1.msra.mxu0 0.0
      %1760 = vmatprep.subr.mxu0 0.0
      %1761 = vmatpush1.msra.mxu0 %v1728
      %1762 = vmatprep.subr.mxu0 0.0
      %1763 = vmatpush2.msra.mxu0 0.0
      %1764 = vmatprep.subr.mxu0 0.0
      %1765 = vmatpush2.msra.mxu0 0.0
      %1766 = vmatprep.subr.mxu0 0.0
      %1767 = vmatpush2.msra.mxu0 0.0
      %1768 = vmatprep.subr.mxu0 0.0
      %1769 = vmatpush2.msra.mxu0 0.0
      %1770 = vmatprep.subr.mxu0 0.0
      %1771 = vmatpush2.msra.mxu0 0.0
      %1772 = vmatprep.subr.mxu0 0.0
      %1773 = vmatpush2.msra.mxu0 0.0
      %1774 = vmatprep.subr.mxu0 0.0
      %1775 = vmatpush2.msra.mxu0 0.0
      %1776 = vmatprep.subr.mxu0 0.0
      %1777 = vmatpush2.msra.mxu0 0.0
      %1778 = vmatprep.subr.mxu0 0.0
      %1779 = vmatpush2.msra.mxu0 0.0
      %1780 = vmatprep.subr.mxu0 0.0
      %1781 = vmatpush2.msra.mxu0 0.0
      %1782 = vmatprep.subr.mxu0 0.0
      %1783 = vmatpush2.msra.mxu0 0.0
      %1784 = vmatprep.subr.mxu0 0.0
      %1785 = vmatpush2.msra.mxu0 0.0
      %1786 = vmatprep.subr.mxu0 0.0
      %1787 = vmatpush2.msra.mxu0 0.0
      %1788 = vmatprep.subr.mxu0 0.0
      %1789 = vmatpush2.msra.mxu0 0.0
      %1790 = vmatprep.subr.mxu0 0.0
      %1791 = vmatpush2.msra.mxu0 0.0
      %1792 = vmatprep.subr.mxu0 0.0
      %1793 = vmatpush2.msra.mxu0 0.0
      %1794 = vmatprep.mubr.f32.mxu0 0.0
      %1795 = vmatmul.mubr.f32.gmra.mxu0 %v1725
      %v1796 = vpop.f32.mrf.mxu0
      %v1797 = vadd.f32 %v1722, %v1796
      %v1798 = vpop.f32.mrf.mxu0
      %1799 = vdwg.mxu0
      %v1800 = vmax.f32 %v1797, 0.0
      %v1801 = vadd.f32 %v1698, %v1800
      %v1802 = vmul.f32 %v1801, %v1801
      %v1803 = vsel %vm1489, %v1802, 0.0
      %1804 = vadd.xlane.f32.xlu0 %v1803
      %v1805 = vpop.xlane.xlu0 %1804
      %v1806 = vrot.slane %v1805, 4
      %v1807 = vadd.f32 %v1805, %v1806
      %v1808 = vrot.slane %v1807, 2
      %v1809 = vadd.f32 %v1807, %v1808
      %v1810 = vrot.slane %v1809, 1
      %v1811 = vadd.f32 %v1809, %v1810
      %s1812 = vtos %v1811
      %v1813 = vstv %s1812
      %v1814 = vmul.f32 %v1813, %v1501
      %v1815 = vadd.f32 %v1814, 1.1920929e-07
      %v1816 = vrsqrt.pop %v1815
      %v1817 = vmul.f32 %v1801, %v1816
      %v1818 = vld [vmem:[%s45] sm:$0xf]
      %v1819 = vmul.f32 %v1817, %v1818
      %v1820 = vld [vmem:[%s47] sm:$0xff]
      %v1821 = vld [vmem:[%s47 + $0x8] sm:$0xff]
      %v1822 = vld [vmem:[%s47 + $0x10] sm:$0xff]
      %v1823 = vld [vmem:[%s47 + $0x18] sm:$0xff]
      %v1824 = vld [vmem:[%s49] sm:$0x1]
      %v1826 = vlaneseq
      %v1827 = vshrl.u32 %v1826, 7
      %v1828 = vsub.s32 0, %v1827
      %v1829 = vrot.slane %v1824, %v1828
      %v1832 = vsel %vm1251, %v1819, 0
      %1834 = vmatprep.subr.mxu0 0.0
      %1835 = vmatpush1.msra.mxu0 0.0
      %1836 = vmatprep.subr.mxu0 0.0
      %1837 = vmatpush1.msra.mxu0 0.0
      %1838 = vmatprep.subr.mxu0 0.0
      %1839 = vmatpush1.msra.mxu0 0.0
      %1840 = vmatprep.subr.mxu0 0.0
      %1841 = vmatpush1.msra.mxu0 0.0
      %1842 = vmatprep.subr.mxu0 0.0
      %1843 = vmatpush1.msra.mxu0 0.0
      %1844 = vmatprep.subr.mxu0 0.0
      %1845 = vmatpush1.msra.mxu0 0.0
      %1846 = vmatprep.subr.mxu0 0.0
      %1847 = vmatpush1.msra.mxu0 0.0
      %1848 = vmatprep.subr.mxu0 0.0
      %1849 = vmatpush1.msra.mxu0 0.0
      %1850 = vmatprep.subr.mxu0 0.0
      %1851 = vmatpush1.msra.mxu0 0.0
      %1852 = vmatprep.subr.mxu0 0.0
      %1853 = vmatpush1.msra.mxu0 0.0
      %1854 = vmatprep.subr.mxu0 0.0
      %1855 = vmatpush1.msra.mxu0 0.0
      %1856 = vmatprep.subr.mxu0 0.0
      %1857 = vmatpush1.msra.mxu0 0.0
      %1858 = vmatprep.subr.mxu0 0.0
      %1859 = vmatpush1.msra.mxu0 %v1823
      %1860 = vmatprep.subr.mxu0 0.0
      %1861 = vmatpush1.msra.mxu0 %v1822
      %1862 = vmatprep.subr.mxu0 0.0
      %1863 = vmatpush1.msra.mxu0 %v1821
      %1864 = vmatprep.subr.mxu0 0.0
      %1865 = vmatpush1.msra.mxu0 %v1820
      %1866 = vmatprep.subr.mxu0 0.0
      %1867 = vmatpush2.msra.mxu0 0.0
      %1868 = vmatprep.subr.mxu0 0.0
      %1869 = vmatpush2.msra.mxu0 0.0
      %1870 = vmatprep.subr.mxu0 0.0
      %1871 = vmatpush2.msra.mxu0 0.0
      %1872 = vmatprep.subr.mxu0 0.0
      %1873 = vmatpush2.msra.mxu0 0.0
      %1874 = vmatprep.subr.mxu0 0.0
      %1875 = vmatpush2.msra.mxu0 0.0
      %1876 = vmatprep.subr.mxu0 0.0
      %1877 = vmatpush2.msra.mxu0 0.0
      %1878 = vmatprep.subr.mxu0 0.0
      %1879 = vmatpush2.msra.mxu0 0.0
      %1880 = vmatprep.subr.mxu0 0.0
      %1881 = vmatpush2.msra.mxu0 0.0
      %1882 = vmatprep.subr.mxu0 0.0
      %1883 = vmatpush2.msra.mxu0 0.0
      %1884 = vmatprep.subr.mxu0 0.0
      %1885 = vmatpush2.msra.mxu0 0.0
      %1886 = vmatprep.subr.mxu0 0.0
      %1887 = vmatpush2.msra.mxu0 0.0
      %1888 = vmatprep.subr.mxu0 0.0
      %1889 = vmatpush2.msra.mxu0 0.0
      %1890 = vmatprep.subr.mxu0 0.0
      %1891 = vmatpush2.msra.mxu0 0.0
      %1892 = vmatprep.subr.mxu0 0.0
      %1893 = vmatpush2.msra.mxu0 0.0
      %1894 = vmatprep.subr.mxu0 0.0
      %1895 = vmatpush2.msra.mxu0 0.0
      %1896 = vmatprep.subr.mxu0 0.0
      %1897 = vmatpush2.msra.mxu0 0.0
      %1898 = vmatprep.mubr.f32.mxu0 0.0
      %1899 = vmatmul.mubr.f32.gmra.mxu0 %v1832
      %v1900 = vpop.f32.mrf.mxu0
      %v1901 = vadd.f32 %v1829, %v1900
      %v1902 = vpop.f32.mrf.mxu0
      %1903 = vdwg.mxu0
      %v1904 = vld [vmem:[%s57] sm:$0x1]
      %v1906 = vlaneseq
      %v1907 = vshrl.u32 %v1906, 7
      %v1908 = vsub.s32 0, %v1907
      %v1909 = vrot.slane %v1904, %v1908
      %v1911 = vmul.f32 %v1901, %v1909
      %v1912 = vld [vmem:[%s55] sm:$0xf]
      %v1913 = vld [vmem:[%s55 + $0x4] sm:$0xf]
      %v1914 = vld [vmem:[%s55 + $0x8] sm:$0xf]
      %v1915 = vld [vmem:[%s55 + $0xc] sm:$0xf]
      %v1916 = vld [vmem:[%s55 + $0x10] sm:$0xf]
      %v1917 = vld [vmem:[%s55 + $0x14] sm:$0xf]
      %v1918 = vld [vmem:[%s55 + $0x18] sm:$0xf]
      %v1919 = vld [vmem:[%s55 + $0x1c] sm:$0xf]
      %v1920 = vld [vmem:[%s55 + $0x20] sm:$0xf]
      %v1921 = vmul.f32 %v1912, %v1911
      %v1922 = vmul.f32 %v1913, %v1911
      %v1923 = vmul.f32 %v1914, %v1911
      %v1924 = vmul.f32 %v1915, %v1911
      %v1925 = vmul.f32 %v1916, %v1911
      %v1926 = vmul.f32 %v1917, %v1911
      %v1927 = vmul.f32 %v1918, %v1911
      %v1928 = vmul.f32 %v1919, %v1911
      %v1929 = vmul.f32 %v1920, %v1911
      %vm1930 = vcmask 125952
      %v1931 = vsel %vm1930, %v1921, 0.0
      %1932 = vadd.xlane.f32.xlu0 %v1931
      %v1933 = vpop.xlane.xlu0 %1932
      %v1934 = vsel %vm1930, %v1922, 0.0
      %1935 = vadd.xlane.f32.xlu0 %v1934
      %v1936 = vpop.xlane.xlu0 %1935
      %v1937 = vsel %vm1930, %v1923, 0.0
      %1938 = vadd.xlane.f32.xlu0 %v1937
      %v1939 = vpop.xlane.xlu0 %1938
      %v1940 = vsel %vm1930, %v1924, 0.0
      %1941 = vadd.xlane.f32.xlu0 %v1940
      %v1942 = vpop.xlane.xlu0 %1941
      %v1943 = vsel %vm1930, %v1925, 0.0
      %1944 = vadd.xlane.f32.xlu0 %v1943
      %v1945 = vpop.xlane.xlu0 %1944
      %v1946 = vsel %vm1930, %v1926, 0.0
      %1947 = vadd.xlane.f32.xlu0 %v1946
      %v1948 = vpop.xlane.xlu0 %1947
      %v1949 = vsel %vm1930, %v1927, 0.0
      %1950 = vadd.xlane.f32.xlu0 %v1949
      %v1951 = vpop.xlane.xlu0 %1950
      %v1952 = vsel %vm1930, %v1928, 0.0
      %1953 = vadd.xlane.f32.xlu0 %v1952
      %v1954 = vpop.xlane.xlu0 %1953
      %v1955 = vsel %vm1930, %v1929, 0.0
      %1956 = vadd.xlane.f32.xlu0 %v1955
      %v1957 = vpop.xlane.xlu0 %1956
      %v1958 = vld [vmem:[%s983] sm:$0xff]
      %v1959 = vld [vmem:[%s51] sm:$0x1]
      %1961 = vset.pattern.permute.xlu0 0
      %1962 = vperm.xlu0 %1961, %v1958
      %v1963 = vpop.permute.xlu0 %1962
      %v1966 = vlaneseq
      %v1967 = vshrl.u32 %v1966, 7
      %v1968 = vsub.s32 0, %v1967
      %v1969 = vrot.slane %v1959, %v1968
      %v1971 = vmul.f32 %v1963, %v1969
      %v1972 = vld [vmem:[%s53] sm:$0x1]
      %v1974 = vlaneseq
      %v1975 = vshrl.u32 %v1974, 7
      %v1976 = vsub.s32 0, %v1975
      %v1977 = vrot.slane %v1972, %v1976
      %v1979 = vadd.f32 %v1971, %v1977
      %v1980 = vmax.f32 %v1979, 0.0
      %v1981 = vld [vmem:[#allocation2] sm:$0x1]
      %v1983 = vlaneseq
      %v1984 = vshrl.u32 %v1983, 7
      %v1985 = vsub.s32 0, %v1984
      %v1986 = vrot.slane %v1981, %v1985
      %1987 = vset.pattern.permute.xlu0 0
      %1988 = vperm.xlu0 %1987, %v1986
      %v1989 = vpop.permute.xlu0 %1988
      %v2000 = vlaneseq
      %v2001 = vand.u32 %v2000, 127
      %v2002 = vlaneseq
      %v2003 = vshrl.u32 %v2002, 7
      %v2004 = vsub.s32 %v2001, %v2003
      %v2005 = vrot.slane %v1933, %v2004
      %v2006 = vlaneseq
      %v2007 = vshrl.u32 %v2006, 7
      %v2008 = vsub.s32 %v2001, %v2007
      %v2009 = vrot.slane %v1936, %v2008
      %v2010 = vlaneseq
      %v2011 = vshrl.u32 %v2010, 7
      %v2012 = vsub.s32 %v2001, %v2011
      %v2013 = vrot.slane %v1939, %v2012
      %v2014 = vlaneseq
      %v2015 = vshrl.u32 %v2014, 7
      %v2016 = vsub.s32 %v2001, %v2015
      %v2017 = vrot.slane %v1942, %v2016
      %v2018 = vlaneseq
      %v2019 = vshrl.u32 %v2018, 7
      %v2020 = vsub.s32 %v2001, %v2019
      %v2021 = vrot.slane %v1945, %v2020
      %v2022 = vlaneseq
      %v2023 = vshrl.u32 %v2022, 7
      %v2024 = vsub.s32 %v2001, %v2023
      %v2025 = vrot.slane %v1948, %v2024
      %v2026 = vlaneseq
      %v2027 = vshrl.u32 %v2026, 7
      %v2028 = vsub.s32 %v2001, %v2027
      %v2029 = vrot.slane %v1951, %v2028
      %v2030 = vlaneseq
      %v2031 = vshrl.u32 %v2030, 7
      %v2032 = vsub.s32 %v2001, %v2031
      %v2033 = vrot.slane %v1954, %v2032
      %v2034 = vlaneseq
      %v2035 = vshrl.u32 %v2034, 7
      %v2036 = vsub.s32 %v2001, %v2035
      %v2037 = vrot.slane %v1957, %v2036
      %vm2038 = vcmask 1041409
      %v2039 = vsel %vm2038, %v2009, %v2005
      %vm2040 = vcmask 1042434
      %v2041 = vsel %vm2040, %v2013, %v2039
      %vm2042 = vcmask 1043459
      %v2043 = vsel %vm2042, %v2017, %v2041
      %vm2044 = vcmask 1044484
      %v2045 = vsel %vm2044, %v2021, %v2043
      %vm2046 = vcmask 1045509
      %v2047 = vsel %vm2046, %v2025, %v2045
      %vm2048 = vcmask 1046534
      %v2049 = vsel %vm2048, %v2029, %v2047
      %vm2050 = vcmask 1047559
      %v2051 = vsel %vm2050, %v2033, %v2049
      %vm2053 = vcmask 72704
      %v2055 = vsel %vm2053, %v1980, 0
      %vm2057 = vcmask 1040384
      %v2058 = vsel %vm2057, %v2037, 0
      %2060 = vmatprep.subr.mxu0 0.0
      %2061 = vmatpush1.msra.mxu0 0.0
      %2062 = vmatprep.subr.mxu0 0.0
      %2063 = vmatpush1.msra.mxu0 0.0
      %2064 = vmatprep.subr.mxu0 0.0
      %2065 = vmatpush1.msra.mxu0 0.0
      %2066 = vmatprep.subr.mxu0 0.0
      %2067 = vmatpush1.msra.mxu0 0.0
      %2068 = vmatprep.subr.mxu0 0.0
      %2069 = vmatpush1.msra.mxu0 0.0
      %2070 = vmatprep.subr.mxu0 0.0
      %2071 = vmatpush1.msra.mxu0 0.0
      %2072 = vmatprep.subr.mxu0 0.0
      %2073 = vmatpush1.msra.mxu0 0.0
      %2074 = vmatprep.subr.mxu0 0.0
      %2075 = vmatpush1.msra.mxu0 0.0
      %2076 = vmatprep.subr.mxu0 0.0
      %2077 = vmatpush1.msra.mxu0 0.0
      %2078 = vmatprep.subr.mxu0 0.0
      %2079 = vmatpush1.msra.mxu0 0.0
      %2080 = vmatprep.subr.mxu0 0.0
      %2081 = vmatpush1.msra.mxu0 0.0
      %2082 = vmatprep.subr.mxu0 0.0
      %2083 = vmatpush1.msra.mxu0 0.0
      %2084 = vmatprep.subr.mxu0 0.0
      %2085 = vmatpush1.msra.mxu0 0.0
      %2086 = vmatprep.subr.mxu0 0.0
      %2087 = vmatpush1.msra.mxu0 0.0
      %2088 = vmatprep.subr.mxu0 0.0
      %2089 = vmatpush1.msra.mxu0 %v2058
      %2090 = vmatprep.subr.mxu0 0.0
      %2091 = vmatpush1.msra.mxu0 %v2051
      %2092 = vmatprep.subr.mxu0 0.0
      %2093 = vmatpush2.msra.mxu0 0.0
      %2094 = vmatprep.subr.mxu0 0.0
      %2095 = vmatpush2.msra.mxu0 0.0
      %2096 = vmatprep.subr.mxu0 0.0
      %2097 = vmatpush2.msra.mxu0 0.0
      %2098 = vmatprep.subr.mxu0 0.0
      %2099 = vmatpush2.msra.mxu0 0.0
      %2100 = vmatprep.subr.mxu0 0.0
      %2101 = vmatpush2.msra.mxu0 0.0
      %2102 = vmatprep.subr.mxu0 0.0
      %2103 = vmatpush2.msra.mxu0 0.0
      %2104 = vmatprep.subr.mxu0 0.0
      %2105 = vmatpush2.msra.mxu0 0.0
      %2106 = vmatprep.subr.mxu0 0.0
      %2107 = vmatpush2.msra.mxu0 0.0
      %2108 = vmatprep.subr.mxu0 0.0
      %2109 = vmatpush2.msra.mxu0 0.0
      %2110 = vmatprep.subr.mxu0 0.0
      %2111 = vmatpush2.msra.mxu0 0.0
      %2112 = vmatprep.subr.mxu0 0.0
      %2113 = vmatpush2.msra.mxu0 0.0
      %2114 = vmatprep.subr.mxu0 0.0
      %2115 = vmatpush2.msra.mxu0 0.0
      %2116 = vmatprep.subr.mxu0 0.0
      %2117 = vmatpush2.msra.mxu0 0.0
      %2118 = vmatprep.subr.mxu0 0.0
      %2119 = vmatpush2.msra.mxu0 0.0
      %2120 = vmatprep.subr.mxu0 0.0
      %2121 = vmatpush2.msra.mxu0 0.0
      %2122 = vmatprep.subr.mxu0 0.0
      %2123 = vmatpush2.msra.mxu0 0.0
      %2124 = vmatprep.mubr.f32.mxu0 0.0
      %2125 = vmatmul.mubr.f32.gmra.mxu0 %v2055
      %v2126 = vpop.f32.mrf.mxu0
      %v2127 = vadd.f32 %v1989, %v2126
      %v2128 = vpop.f32.mrf.mxu0
      %2129 = vdwg.mxu0
      %2130 = vst.msk [vmem:[%s987] sm:$0xff] %vm1229, %v2127
      %p2131 = scmp.lt.s32.totalorder %s74, 1
      %s2132 = scalar_select %p2131, %s74, 1
      %s2133 = smul.addr %s2132, 8
      %s2134 = scalar_lea.vmem %s61, %s2133
      // Predicated region
      $region141: #{tpu_custom_call.1} parent=139 // pred_check
        %p2135 = pneg %p742
      $region142: #{tpu_custom_call.1} parent=139 // pred_check_branch
        %2137 = sbr.rel (%p2135) target = $region144
      $region143: #{tpu_custom_call.1} parent=139 // pred_region
        _
      $region144: #{tpu_custom_call.1} parent=139 // pred_fallthru
        _
    $region140: #{tpu_custom_call.1} parent=5 // pred_fallthru
      _
    %p2138 = scmp.le.s32.totalorder 2, %s69
    // Predicated region
    $region145: #{tpu_custom_call.1} parent=5 // pred_check
      %p2139 = pneg %p2138
    $region146: #{tpu_custom_call.1} parent=5 // pred_check_branch
      %2141 = sbr.rel (%p2139) target = $region148
    $region147: #{tpu_custom_call.1} parent=5 // pred_region
      %s2142 = ssub.s32 %s69, 2
      // Predicated region
      $region149: #{tpu_custom_call.1} parent=147 // pred_check
        %p2143 = pneg %p748
      $region150: #{tpu_custom_call.1} parent=147 // pred_check_branch
        %2145 = sbr.rel (%p2143) target = $region152
      $region151: #{tpu_custom_call.1} parent=147 // pred_region
        %p2146 = scmp.lt.s32.totalorder %s75, 1
        %s2147 = scalar_select %p2146, %s75, 1
        %s2148 = smul.addr %s2147, 8
        %s2149 = scalar_lea.vmem %s61, %s2148
      $region152: #{tpu_custom_call.1} parent=147 // pred_fallthru
        _
    $region148: #{tpu_custom_call.1} parent=5 // pred_fallthru
      _
  $region6: #{tpu_custom_call.1} parent=0 // loop_footer
    %s73 = sadd.s32 1, %s69
  $region7: #{tpu_custom_call.1} parent=0 // loop_footer_branch
    %68 = sbr.rel target = $region3
  $region8: #{tpu_custom_call.1} parent=0 // loop_exit
    _

</llo_original>
